<compile_context>
chip_gen: v5e
topology: v5e:2x2
jax: 0.10.0
libtpu: 0.0.40
codegen_flags: <defaults>
</compile_context>

<pallas_src>
import functools

import jax
import jax.numpy as jnp
from jax.experimental import pallas as pl
from jax.experimental.pallas import tpu as pltpu

PATCH = 224                    # hard-coded in MetricModel.forward
SUB = 4                        # swin-style patch-embed kernel/stride
EMBED = 64                     # embedding / hidden width
K_IN = 3 * SUB * SUB           # 48 im2col features per token
T_TOK = (PATCH // SUB) ** 2    # 3136 valid tokens per 224x224 patch
T_PAD = 3200                   # 25*128 lane-aligned token axis (zero padded)
P_BLK_MAX = 16                 # patch pairs per grid step (VMEM-budgeted)


def _cdiv(a, b):
    return -(-a // b)


# ----------------------------------------------------------------------------
# Pallas kernel: one grid step == p_blk (ref, dist) patch pairs.
# ----------------------------------------------------------------------------
def _iqa_kernel(stk_ref, we_pm_ref, we_ref, be_ref, w1_ref, w2_ref, b1_ref,
                w3_ref, b3_ref, out_ref, *, p_blk):
    inv_t = jnp.float32(1.0 / T_TOK)          # divide by *valid* token count
    we_pm = we_pm_ref[...]                    # (EMBED, 2*K_IN) bf16, pre-cast
    # hoisted one-hot lane index (avoids re-broadcasting inside the loop)
    lane_idx = jax.lax.broadcasted_iota(jnp.int32, (1, p_blk), 1)

    def body(p, carry):
        p_diff, m_dist = carry                # (EMBED, p_blk), (K_IN, p_blk) f32
        tok = stk_ref[p]                      # (2*K_IN, T_PAD) bf16
        # FR branch via the MXU: We_pm @ [ref; dist] == We @ (ref - dist)
        # (bias cancels in the difference).
        fd = jnp.dot(we_pm, tok, preferred_element_type=jnp.float32)  # (EMBED, T_PAD)
        col_fr = jnp.sum(jnp.abs(fd), axis=1, keepdims=True) * inv_t  # (EMBED, 1)
        # NR branch: global token pooling commutes with the linear embed, so
        # pool the raw dist features (rows 48:96) with f32 accumulation.
        col_nr = (jnp.sum(tok[K_IN:, :], axis=1, keepdims=True,
                          dtype=jnp.float32) * inv_t)                 # (K_IN, 1)
        sel = (lane_idx == p).astype(jnp.float32)                     # (1, p_blk)
        return p_diff + col_fr * sel, m_dist + col_nr * sel

    p_diff, m_dist = jax.lax.fori_loop(
        0, p_blk, body,
        (jnp.zeros((EMBED, p_blk), jnp.float32),
         jnp.zeros((K_IN, p_blk), jnp.float32)))

    # NR embedding applied once per block on the pooled features.
    p_dist = (jnp.dot(we_ref[...], m_dist, preferred_element_type=jnp.float32)
              + be_ref[...])                                          # (EMBED, p_blk)

    # Quality head: two-branch linear -> GELU -> scalar, column orientation.
    h = (jnp.dot(w1_ref[...], p_diff, preferred_element_type=jnp.float32)
         + jnp.dot(w2_ref[...], p_dist, preferred_element_type=jnp.float32)
         + b1_ref[...])                                               # (EMBED, p_blk)
    h = jax.nn.gelu(h, approximate=True)
    score = (jnp.dot(w3_ref[...], h, preferred_element_type=jnp.float32)
             + b3_ref[...])                                           # (1, p_blk)
    out_ref[0] = score


# ----------------------------------------------------------------------------
# Plain-JAX glue: exact replica of the PyTorch unfold/reshape + 4x4 im2col,
# emitted as one composed transpose/reshape chain, lane-dense token axis last.
# ----------------------------------------------------------------------------
def _patch_tokens(x):
    b, c, h, w = x.shape
    nh, nw = h // PATCH, w // PATCH
    x = x[:, :, :nh * PATCH, :nw * PATCH]     # unfold drops partial patches
    # exact replica of x.unfold(2,224,224).unfold(3,224,224).reshape(-1,3,224,224)
    p = x.reshape(b, c, nh, PATCH, nw, PATCH).transpose(0, 1, 2, 4, 3, 5)
    p = p.reshape(-1, 3, PATCH, PATCH)
    n = p.shape[0]
    t = PATCH // SUB
    # im2col: feature axis (c, ph, pw)=48, token axis (th, tw)=3136 last
    q = p.reshape(n, 3, t, SUB, t, SUB).transpose(0, 1, 3, 5, 2, 4)
    return q.reshape(n, K_IN, t * t)


def init_params(key):
    ks = jax.random.split(key, 4)
    scale = 0.05
    return dict(
        # patch-embed weight as (C_out, K_in): in-kernel matmuls are the
        # canonical (64,96)@(96,T) / (64,48)@(48,P) forms, no transposes.
        we=jax.random.normal(ks[0], (EMBED, K_IN), jnp.float32) * scale,
        be=jnp.zeros((EMBED, 1), jnp.float32),
        w1=jax.random.normal(ks[1], (EMBED, EMBED), jnp.float32) * scale,
        w2=jax.random.normal(ks[2], (EMBED, EMBED), jnp.float32) * scale,
        b1=jnp.zeros((EMBED, 1), jnp.float32),
        w3=jax.random.normal(ks[3], (1, EMBED), jnp.float32) * scale,
        b3=jnp.zeros((1, 1), jnp.float32),
    )


def _full_spec(a):
    nd = a.ndim
    return pl.BlockSpec(a.shape, lambda n: (0,) * nd)


@jax.jit
def metric_model_forward(ref, dist, params):
    ref_tok = _patch_tokens(ref)              # (N, 48, 3136) f32
    dist_tok = _patch_tokens(dist)
    n_patches = ref_tok.shape[0]

    # Block sizing (pad-and-mask): keep n_blocks >= 2 whenever possible so the
    # 'parallel' grid axis feeds both v7x TensorCores and DMA/compute overlap;
    # p_blk <= 16 keeps the double-buffered (p_blk,96,3200) bf16 tile (+ one
    # live (64,3200) f32 temporary) at ~20 MiB, inside the 48 MiB VMEM budget.
    n_blocks = max(2 if n_patches >= 2 else 1, _cdiv(n_patches, P_BLK_MAX))
    p_blk = _cdiv(n_patches, n_blocks)
    n_pad = n_blocks * p_blk

    # Stacked layout: ref features in rows 0:48, dist features in rows 48:96.
    stacked = jnp.concatenate([ref_tok, dist_tok], axis=1)          # (N, 96, 3136)
    stacked = jnp.pad(
        stacked, ((0, n_pad - n_patches), (0, 0), (0, T_PAD - T_TOK)))
    stacked = stacked.astype(jnp.bfloat16)                          # (n_pad, 96, 3200)

    we = params["we"]
    we_pm = jnp.concatenate([we, -we], axis=1).astype(jnp.bfloat16)  # (64, 96) bf16

    scores = pl.pallas_call(
        functools.partial(_iqa_kernel, p_blk=p_blk),
        out_shape=jax.ShapeDtypeStruct((n_blocks, 1, p_blk), jnp.float32),
        grid_spec=pltpu.PrefetchScalarGridSpec(
            num_scalar_prefetch=0,
            grid=(n_blocks,),
            in_specs=[
                pl.BlockSpec((p_blk, 2 * K_IN, T_PAD), lambda n: (n, 0, 0)),
                _full_spec(we_pm), _full_spec(we), _full_spec(params["be"]),
                _full_spec(params["w1"]), _full_spec(params["w2"]),
                _full_spec(params["b1"]), _full_spec(params["w3"]),
                _full_spec(params["b3"]),
            ],
            out_specs=pl.BlockSpec((1, 1, p_blk), lambda n: (n, 0, 0)),
        ),
        compiler_params=pltpu.CompilerParams(
            dimension_semantics=("parallel",),   # independent per-block scores
            vmem_limit_bytes=48 * 1024 * 1024,   # < 64 MiB physical on v7x
        ),
    )(stacked, we_pm, we, params["be"], params["w1"], params["w2"],
      params["b1"], params["w3"], params["b3"])

    # .mean() over the real patch scores only (exclude zero-padded patches).
    return jnp.mean(scores.reshape(-1)[:n_patches])


if __name__ == "__main__":
    key = jax.random.PRNGKey(0)
    k_ref, k_dist = jax.random.split(key)

    # Smallest shapes consistent with the forward (patch size hard-coded to
    # 224): (2, 3, 224, 224) -> 2 (ref, dist) patch pairs -> 2 grid blocks.
    ref = jax.random.uniform(k_ref, (2, 3, PATCH, PATCH), jnp.float32)
    dist = jnp.clip(ref + 0.1 * jax.random.normal(k_dist, ref.shape), 0.0, 1.0)

    params = init_params(jax.random.PRNGKey(42))

    score = metric_model_forward(ref, dist, params)
    jax.block_until_ready(score)
    assert score.shape == () and score.dtype == jnp.float32
    print("KERNEL_OK")
</pallas_src>

<mosaic_0001>
module attributes {stable_mosaic.version = 11 : i64} {
  func.func @_iqa_kernel(%arg0: i32, %arg1: memref<1x96x3200xbf16, #tpu.memory_space<vmem>>, %arg2: memref<64x96xbf16, #tpu.memory_space<vmem>>, %arg3: memref<64x48xf32, #tpu.memory_space<vmem>>, %arg4: memref<64x1xf32, #tpu.memory_space<vmem>>, %arg5: memref<64x64xf32, #tpu.memory_space<vmem>>, %arg6: memref<64x64xf32, #tpu.memory_space<vmem>>, %arg7: memref<64x1xf32, #tpu.memory_space<vmem>>, %arg8: memref<1x64xf32, #tpu.memory_space<vmem>>, %arg9: memref<1x1xf32, #tpu.memory_space<vmem>>, %arg10: memref<1x1x1xf32, #tpu.memory_space<vmem>>) attributes {dimension_semantics = [#tpu.dimension_semantics<parallel>], iteration_bounds = array<i64: 2>, scalar_prefetch = 0 : i64, scratch_operands = 0 : i64, tpu.core_type = #tpu.core_type<tc>, window_params = [{transform_indices = @transform_0, window_bounds = array<i64: 1, 96, 3200>}, {pipeline_mode = #tpu.pipeline_mode<synchronous>, transform_indices = @transform_1, window_bounds = array<i64: 64, 96>}, {pipeline_mode = #tpu.pipeline_mode<synchronous>, transform_indices = @transform_2, window_bounds = array<i64: 64, 48>}, {pipeline_mode = #tpu.pipeline_mode<synchronous>, transform_indices = @transform_3, window_bounds = array<i64: 64, 1>}, {pipeline_mode = #tpu.pipeline_mode<synchronous>, transform_indices = @transform_4, window_bounds = array<i64: 64, 64>}, {pipeline_mode = #tpu.pipeline_mode<synchronous>, transform_indices = @transform_5, window_bounds = array<i64: 64, 64>}, {pipeline_mode = #tpu.pipeline_mode<synchronous>, transform_indices = @transform_6, window_bounds = array<i64: 64, 1>}, {pipeline_mode = #tpu.pipeline_mode<synchronous>, transform_indices = @transform_7, window_bounds = array<i64: 1, 64>}, {pipeline_mode = #tpu.pipeline_mode<synchronous>, transform_indices = @transform_8, window_bounds = array<i64: 1, 1>}, {transform_indices = @transform_9, window_bounds = array<i64: 1, 1, 1>}]} {
    %c0 = arith.constant 0 : index
    %c0_0 = arith.constant 0 : index
    %0 = vector.load %arg2[%c0, %c0_0] : memref<64x96xbf16, #tpu.memory_space<vmem>>, vector<64x96xbf16>
    %1 = tpu.iota {dimensions = array<i32: 1>} : vector<1x1xi32>
    %cst = arith.constant 0.000000e+00 : f32
    %2 = vector.broadcast %cst : f32 to vector<64x1xf32>
    %cst_1 = arith.constant 0.000000e+00 : f32
    %3 = vector.broadcast %cst_1 : f32 to vector<48x1xf32>
    %cst_2 = arith.constant 3.18877544E-4 : f32
    %c0_i32 = arith.constant 0 : i32
    %4 = arith.index_cast %c0_i32 : i32 to index
    %c0_3 = arith.constant 0 : index
    %c0_4 = arith.constant 0 : index
    %5 = vector.load %arg1[%4, %c0_3, %c0_4] : memref<1x96x3200xbf16, #tpu.memory_space<vmem>>, vector<1x96x3200xbf16>
    %6 = vector.shape_cast %5 : vector<1x96x3200xbf16> to vector<96x3200xbf16>
    %cst_5 = arith.constant dense<0.000000e+00> : vector<64x3200xf32>
    %7 = tpu.matmul %0, %6, %cst_5 {dimension_numbers = #tpu.dot_dimension_numbers<[1], [0], [0], [1], [0, 0, 1, 1], [], []>} : vector<64x96xbf16>, vector<96x3200xbf16>, vector<64x3200xf32> -> vector<64x3200xf32>
    %8 = math.absf %7 : vector<64x3200xf32>
    %cst_6 = arith.constant dense<0.000000e+00> : vector<64xf32>
    %9 = vector.multi_reduction <add>, %8, %cst_6 [1] : vector<64x3200xf32> to vector<64xf32>
    %10 = vector.shape_cast %9 : vector<64xf32> to vector<64x1xf32>
    %11 = vector.broadcast %cst_2 : f32 to vector<64x1xf32>
    %12 = arith.mulf %10, %11 : vector<64x1xf32>
    %13 = vector.extract_strided_slice %6 {offsets = [48, 0], sizes = [48, 3200], strides = [1, 1]} : vector<96x3200xbf16> to vector<48x3200xbf16>
    %14 = arith.extf %13 : vector<48x3200xbf16> to vector<48x3200xf32>
    %cst_7 = arith.constant dense<0.000000e+00> : vector<48xf32>
    %15 = vector.multi_reduction <add>, %14, %cst_7 [1] : vector<48x3200xf32> to vector<48xf32>
    %16 = vector.shape_cast %15 : vector<48xf32> to vector<48x1xf32>
    %17 = vector.broadcast %cst_2 : f32 to vector<48x1xf32>
    %18 = arith.mulf %16, %17 : vector<48x1xf32>
    %19 = vector.broadcast %c0_i32 : i32 to vector<1x1xi32>
    %20 = arith.cmpi eq, %1, %19 : vector<1x1xi32>
    %21 = arith.extui %20 : vector<1x1xi1> to vector<1x1xi32>
    %22 = arith.sitofp %21 : vector<1x1xi32> to vector<1x1xf32>
    %23 = vector.broadcast %22 : vector<1x1xf32> to vector<64x1xf32>
    %24 = arith.mulf %12, %23 : vector<64x1xf32>
    %25 = arith.addf %2, %24 : vector<64x1xf32>
    %26 = vector.broadcast %22 : vector<1x1xf32> to vector<48x1xf32>
    %27 = arith.mulf %18, %26 : vector<48x1xf32>
    %28 = arith.addf %3, %27 : vector<48x1xf32>
    %c1_i32 = arith.constant 1 : i32
    %c0_8 = arith.constant 0 : index
    %c0_9 = arith.constant 0 : index
    %29 = vector.load %arg3[%c0_8, %c0_9] : memref<64x48xf32, #tpu.memory_space<vmem>>, vector<64x48xf32>
    %cst_10 = arith.constant dense<0.000000e+00> : vector<64x1xf32>
    %30 = tpu.matmul %29, %28, %cst_10 {dimension_numbers = #tpu.dot_dimension_numbers<[1], [0], [0], [1], [0, 0, 1, 1], [], []>} : vector<64x48xf32>, vector<48x1xf32>, vector<64x1xf32> -> vector<64x1xf32>
    %c0_11 = arith.constant 0 : index
    %c0_12 = arith.constant 0 : index
    %31 = vector.load %arg4[%c0_11, %c0_12] : memref<64x1xf32, #tpu.memory_space<vmem>>, vector<64x1xf32>
    %32 = arith.addf %30, %31 : vector<64x1xf32>
    %c0_13 = arith.constant 0 : index
    %c0_14 = arith.constant 0 : index
    %33 = vector.load %arg5[%c0_13, %c0_14] : memref<64x64xf32, #tpu.memory_space<vmem>>, vector<64x64xf32>
    %cst_15 = arith.constant dense<0.000000e+00> : vector<64x1xf32>
    %34 = tpu.matmul %33, %25, %cst_15 {dimension_numbers = #tpu.dot_dimension_numbers<[1], [0], [0], [1], [0, 0, 1, 1], [], []>} : vector<64x64xf32>, vector<64x1xf32>, vector<64x1xf32> -> vector<64x1xf32>
    %c0_16 = arith.constant 0 : index
    %c0_17 = arith.constant 0 : index
    %35 = vector.load %arg6[%c0_16, %c0_17] : memref<64x64xf32, #tpu.memory_space<vmem>>, vector<64x64xf32>
    %cst_18 = arith.constant dense<0.000000e+00> : vector<64x1xf32>
    %36 = tpu.matmul %35, %32, %cst_18 {dimension_numbers = #tpu.dot_dimension_numbers<[1], [0], [0], [1], [0, 0, 1, 1], [], []>} : vector<64x64xf32>, vector<64x1xf32>, vector<64x1xf32> -> vector<64x1xf32>
    %37 = arith.addf %34, %36 : vector<64x1xf32>
    %c0_19 = arith.constant 0 : index
    %c0_20 = arith.constant 0 : index
    %38 = vector.load %arg7[%c0_19, %c0_20] : memref<64x1xf32, #tpu.memory_space<vmem>>, vector<64x1xf32>
    %39 = arith.addf %37, %38 : vector<64x1xf32>
    %40 = arith.mulf %39, %39 : vector<64x1xf32>
    %41 = arith.mulf %39, %40 : vector<64x1xf32>
    %cst_21 = arith.constant 4.471500e-02 : f32
    %42 = vector.broadcast %cst_21 : f32 to vector<64x1xf32>
    %43 = arith.mulf %42, %41 : vector<64x1xf32>
    %44 = arith.addf %39, %43 : vector<64x1xf32>
    %cst_22 = arith.constant 0.797884583 : f32
    %45 = vector.broadcast %cst_22 : f32 to vector<64x1xf32>
    %46 = arith.mulf %45, %44 : vector<64x1xf32>
    %47 = math.tanh %46 : vector<64x1xf32>
    %cst_23 = arith.constant 1.000000e+00 : f32
    %48 = vector.broadcast %cst_23 : f32 to vector<64x1xf32>
    %49 = arith.addf %48, %47 : vector<64x1xf32>
    %cst_24 = arith.constant 5.000000e-01 : f32
    %50 = vector.broadcast %cst_24 : f32 to vector<64x1xf32>
    %51 = arith.mulf %50, %49 : vector<64x1xf32>
    %52 = arith.mulf %39, %51 : vector<64x1xf32>
    %c0_25 = arith.constant 0 : index
    %c0_26 = arith.constant 0 : index
    %53 = vector.load %arg8[%c0_25, %c0_26] : memref<1x64xf32, #tpu.memory_space<vmem>>, vector<1x64xf32>
    %cst_27 = arith.constant dense<0.000000e+00> : vector<1x1xf32>
    %54 = tpu.matmul %53, %52, %cst_27 {dimension_numbers = #tpu.dot_dimension_numbers<[1], [0], [0], [1], [0, 0, 1, 1], [], []>} : vector<1x64xf32>, vector<64x1xf32>, vector<1x1xf32> -> vector<1x1xf32>
    %c0_28 = arith.constant 0 : index
    %c0_29 = arith.constant 0 : index
    %55 = vector.load %arg9[%c0_28, %c0_29] : memref<1x1xf32, #tpu.memory_space<vmem>>, vector<1x1xf32>
    %56 = arith.addf %54, %55 : vector<1x1xf32>
    %c0_30 = arith.constant 0 : index
    %c0_31 = arith.constant 0 : index
    %c0_32 = arith.constant 0 : index
    %57 = vector.load %arg10[%c0_30, %c0_31, %c0_32] : memref<1x1x1xf32, #tpu.memory_space<vmem>>, vector<1x1x1xf32>
    %58 = vector.shape_cast %57 : vector<1x1x1xf32> to vector<1x1xf32>
    %59 = vector.shape_cast %56 : vector<1x1xf32> to vector<1x1x1xf32>
    tpu.vector_store %arg10[%c0_30, %c0_31, %c0_32], %59 {strides = array<i32>} : memref<1x1x1xf32, #tpu.memory_space<vmem>>, vector<1x1x1xf32>,
    return
  }
  func.func @transform_0(%arg0: i32) -> (i32, i32, i32) {
    %c0_i32 = arith.constant 0 : i32
    %c0_i32_0 = arith.constant 0 : i32
    %c0_i32_1 = arith.constant 0 : i32
    return %arg0, %c0_i32, %c0_i32_0 : i32, i32, i32
  }
  func.func @transform_1(%arg0: i32) -> (i32, i32) {
    %c0_i32 = arith.constant 0 : i32
    %c0_i32_0 = arith.constant 0 : i32
    %c0_i32_1 = arith.constant 0 : i32
    return %c0_i32, %c0_i32_0 : i32, i32
  }
  func.func @transform_2(%arg0: i32) -> (i32, i32) {
    %c0_i32 = arith.constant 0 : i32
    %c0_i32_0 = arith.constant 0 : i32
    %c0_i32_1 = arith.constant 0 : i32
    return %c0_i32, %c0_i32_0 : i32, i32
  }
  func.func @transform_3(%arg0: i32) -> (i32, i32) {
    %c0_i32 = arith.constant 0 : i32
    %c0_i32_0 = arith.constant 0 : i32
    %c0_i32_1 = arith.constant 0 : i32
    return %c0_i32, %c0_i32_0 : i32, i32
  }
  func.func @transform_4(%arg0: i32) -> (i32, i32) {
    %c0_i32 = arith.constant 0 : i32
    %c0_i32_0 = arith.constant 0 : i32
    %c0_i32_1 = arith.constant 0 : i32
    return %c0_i32, %c0_i32_0 : i32, i32
  }
  func.func @transform_5(%arg0: i32) -> (i32, i32) {
    %c0_i32 = arith.constant 0 : i32
    %c0_i32_0 = arith.constant 0 : i32
    %c0_i32_1 = arith.constant 0 : i32
    return %c0_i32, %c0_i32_0 : i32, i32
  }
  func.func @transform_6(%arg0: i32) -> (i32, i32) {
    %c0_i32 = arith.constant 0 : i32
    %c0_i32_0 = arith.constant 0 : i32
    %c0_i32_1 = arith.constant 0 : i32
    return %c0_i32, %c0_i32_0 : i32, i32
  }
  func.func @transform_7(%arg0: i32) -> (i32, i32) {
    %c0_i32 = arith.constant 0 : i32
    %c0_i32_0 = arith.constant 0 : i32
    %c0_i32_1 = arith.constant 0 : i32
    return %c0_i32, %c0_i32_0 : i32, i32
  }
  func.func @transform_8(%arg0: i32) -> (i32, i32) {
    %c0_i32 = arith.constant 0 : i32
    %c0_i32_0 = arith.constant 0 : i32
    %c0_i32_1 = arith.constant 0 : i32
    return %c0_i32, %c0_i32_0 : i32, i32
  }
  func.func @transform_9(%arg0: i32) -> (i32, i32, i32) {
    %c0_i32 = arith.constant 0 : i32
    %c0_i32_0 = arith.constant 0 : i32
    %c0_i32_1 = arith.constant 0 : i32
    return %arg0, %c0_i32, %c0_i32_0 : i32, i32, i32
  }
}

</mosaic_0001>

<llo_original>
// kernel: neg.1
$region0: #{neg.1}
  #allocation0 [shape = 's32[1]{0}', space=sflag, size = 0x4, scoped, tag = 'scoped memory for neg.1']
  %s0 = inlined_call_operand.vmem [shape: f32[64,48], index: 0, kind: input, shape index: {}]
  %s1 = inlined_call_operand.vmem [shape: bf16[64,48], index: 1, kind: output, shape index: {}]
  %v2 = vld [vmem:[%s0] sm:$0xff]
  %3 = xla_tuple %v2
  %4 = xla_tuple %3
  %v5 = vxor.u32 %v2, 2147483648
  %6 = xla_tuple %v5
  %v7 = vpack.c.bf16 0.0, %v5
  %8 = vst [vmem:[%s1] sm:$0xf] %v7
  %s9 = scalar_lea.vmem %s0, 8
  %v10 = vld [vmem:[%s9] sm:$0xff]
  %11 = xla_tuple %v10
  %12 = xla_tuple %11
  %v13 = vxor.u32 %v10, 2147483648
  %14 = xla_tuple %v13
  %s15 = scalar_lea.vmem %s1, 4
  %v16 = vpack.c.bf16 0.0, %v13
  %17 = vst [vmem:[%s15] sm:$0xf] %v16
  %s18 = scalar_lea.vmem %s0, 16
  %v19 = vld [vmem:[%s18] sm:$0xff]
  %20 = xla_tuple %v19
  %21 = xla_tuple %20
  %v22 = vxor.u32 %v19, 2147483648
  %23 = xla_tuple %v22
  %s24 = scalar_lea.vmem %s1, 8
  %v25 = vpack.c.bf16 0.0, %v22
  %26 = vst [vmem:[%s24] sm:$0xf] %v25
  %s27 = scalar_lea.vmem %s0, 24
  %v28 = vld [vmem:[%s27] sm:$0xff]
  %29 = xla_tuple %v28
  %30 = xla_tuple %29
  %v31 = vxor.u32 %v28, 2147483648
  %32 = xla_tuple %v31
  %s33 = scalar_lea.vmem %s1, 12
  %v34 = vpack.c.bf16 0.0, %v31
  %35 = vst [vmem:[%s33] sm:$0xf] %v34
  %s36 = scalar_lea.vmem %s0, 32
  %v37 = vld [vmem:[%s36] sm:$0xff]
  %38 = xla_tuple %v37
  %39 = xla_tuple %38
  %v40 = vxor.u32 %v37, 2147483648
  %41 = xla_tuple %v40
  %s42 = scalar_lea.vmem %s1, 16
  %v43 = vpack.c.bf16 0.0, %v40
  %44 = vst [vmem:[%s42] sm:$0xf] %v43
  %s45 = scalar_lea.vmem %s0, 40
  %v46 = vld [vmem:[%s45] sm:$0xff]
  %47 = xla_tuple %v46
  %48 = xla_tuple %47
  %v49 = vxor.u32 %v46, 2147483648
  %50 = xla_tuple %v49
  %s51 = scalar_lea.vmem %s1, 20
  %v52 = vpack.c.bf16 0.0, %v49
  %53 = vst [vmem:[%s51] sm:$0xf] %v52

// kernel: metric_model_forward.1
$region0: #{metric_model_forward.1}
  #allocation0 [shape = 'u32[]', space=smem, size = 0x4, offset = 0x4, fixed_abs, tag = 'smem constant byte address 0x4 - core index']
  #allocation1 [shape = 'u32[72,128]{1,0:T(1,128)}', space=vmem, size = 0x9000, scoped, tag = 'internal scratch']
  #allocation2 [shape = 'f32[1,1]{1,0:T(1,128)S(1)}', space=vmem, size = 0x200, scoped, tag = 'scoped memory for metric_model_forward.1']
  %s0 = inlined_call_operand.vmem [shape: bf16[2,96,3200], index: 0, kind: input, shape index: {}]
  %s1 = inlined_call_operand.vmem [shape: bf16[64,96], index: 1, kind: input, shape index: {}]
  %s2 = inlined_call_operand.vmem [shape: f32[64,48], index: 2, kind: input, shape index: {}]
  %s3 = inlined_call_operand.vmem [shape: f32[64,1], index: 3, kind: input, shape index: {}]
  %s4 = inlined_call_operand.vmem [shape: f32[64,64], index: 4, kind: input, shape index: {}]
  %s5 = inlined_call_operand.vmem [shape: f32[64,64], index: 5, kind: input, shape index: {}]
  %s6 = inlined_call_operand.vmem [shape: f32[64,1], index: 6, kind: input, shape index: {}]
  %s7 = inlined_call_operand.vmem [shape: f32[1,64], index: 7, kind: input, shape index: {}]
  %s8 = inlined_call_operand.<no memory space> [shape: f32[1,1], index: 8, kind: input, shape index: {}]
  %s9 = inlined_call_operand.vmem [shape: f32[2,1,1], index: 9, kind: output, shape index: {}]
  %s10 = sld [smem:[#allocation0]]
  $region69: #{metric_model_forward.1} parent=0
    _
  %s12 = ssub.s32 1, %s10
  %s13 = scalar_select 0, %s12, %s10
  %v14 = vstv %s8
  %15 = vst [vmem:[#allocation2] sm:$0x1] %v14
  loop: start=0, step=1, limit=4
  $region2: #{metric_model_forward.1} parent=0 // loop_pre_header
    _
  $region3: #{metric_model_forward.1} parent=0 // loop_header
    %s17 = sphi 0, %s21
    %p18 = scmp.ge.s32.totalorder %s17, 4
    %s27 = sphi 0, %s29
    %s30 = sphi 0, %s27
    %s31 = sphi 0, %s30
    %s47 = sphi 0, %s31
    %s51 = sphi 0, %s51
    %s53 = sphi 0, %s51
    %s54 = sphi 0, %s53
    %s68 = sphi 0, %s54
    %s72 = sphi 0, %s72
    %s74 = sphi 0, %s72
    %s75 = sphi 0, %s74
    %s89 = sphi 0, %s75
    %s93 = sphi 0, %s93
    %s95 = sphi 0, %s93
    %s96 = sphi 0, %s95
    %s110 = sphi 0, %s96
    %s114 = sphi 0, %s114
    %s116 = sphi 0, %s114
    %s117 = sphi 0, %s116
    %s131 = sphi 0, %s117
    %s135 = sphi 0, %s135
    %s137 = sphi 0, %s135
    %s138 = sphi 0, %s137
    %s152 = sphi 0, %s138
    %s156 = sphi 0, %s156
    %s158 = sphi 0, %s156
    %s159 = sphi 0, %s158
    %s173 = sphi 0, %s159
    %s177 = sphi 0, %s177
    %s179 = sphi 0, %s177
    %s180 = sphi 0, %s179
    %s194 = sphi 0, %s180
    %s198 = sphi 0, %s198
    %s200 = sphi 0, %s198
    %s201 = sphi 0, %s200
    %s215 = sphi 0, %s201
    %s221 = sphi 0, %s223
    %s224 = sphi 0, %s221
    %s225 = sphi 0, %s224
    %s241 = sphi 0, %s225
  $region4: #{metric_model_forward.1} parent=0 // loop_header_branch
    %20 = sbr.rel (%p18) target = $region8
  $region5: #{metric_model_forward.1} parent=0 // loop_body
    %s22 = ssub.s32 %s17, 1
    %s23 = ssub.s32 %s17, 2
    %s24 = sadd.s32 %s17, 1
    %s25 = ssub.s32 %s17, %s24
    %p26 = scmp.eq.s32.totalorder %s25, 0
    %s28 = sadd.s32 %s27, 1
    %s29 = scalar_select %p26, %s27, %s28
    %p32 = pneg %p26
    %p33 = scmp.eq.s32.totalorder %s17, 1
    %p34 = por %p32, %p33
    %p35 = scmp.ne.s32.totalorder %s27, %s30
    %p36 = scmp.eq.s32.totalorder %s17, 0
    %p37 = por %p35, %p36
    %p38 = scmp.ne.s32.totalorder %s27, %s30
    %p39 = scmp.eq.s32.totalorder %s22, 1
    %p40 = por %p38, %p39
    %p41 = scmp.ne.s32.totalorder %s30, %s31
    %p42 = scmp.eq.s32.totalorder %s22, 0
    %p43 = por %p41, %p42
    %p44 = scmp.ne.s32.totalorder %s30, %s31
    %p45 = scmp.eq.s32.totalorder %s23, 1
    %p46 = por %p44, %p45
    %p48 = scmp.ne.s32.totalorder %s31, %s47
    %p49 = scmp.eq.s32.totalorder %s23, 0
    %p50 = por %p48, %p49
    %s52 = sadd.s32 %s51, 1
    %p55 = scmp.eq.s32.totalorder %s17, 1
    %p56 = scmp.ne.s32.totalorder %s51, %s53
    %p57 = scmp.eq.s32.totalorder %s17, 0
    %p58 = por %p56, %p57
    %p59 = scmp.ne.s32.totalorder %s51, %s53
    %p60 = scmp.eq.s32.totalorder %s22, 1
    %p61 = por %p59, %p60
    %p62 = scmp.ne.s32.totalorder %s53, %s54
    %p63 = scmp.eq.s32.totalorder %s22, 0
    %p64 = por %p62, %p63
    %p65 = scmp.ne.s32.totalorder %s53, %s54
    %p66 = scmp.eq.s32.totalorder %s23, 1
    %p67 = por %p65, %p66
    %p69 = scmp.ne.s32.totalorder %s54, %s68
    %p70 = scmp.eq.s32.totalorder %s23, 0
    %p71 = por %p69, %p70
    %s73 = sadd.s32 %s72, 1
    %p76 = scmp.eq.s32.totalorder %s17, 1
    %p77 = scmp.ne.s32.totalorder %s72, %s74
    %p78 = scmp.eq.s32.totalorder %s17, 0
    %p79 = por %p77, %p78
    %p80 = scmp.ne.s32.totalorder %s72, %s74
    %p81 = scmp.eq.s32.totalorder %s22, 1
    %p82 = por %p80, %p81
    %p83 = scmp.ne.s32.totalorder %s74, %s75
    %p84 = scmp.eq.s32.totalorder %s22, 0
    %p85 = por %p83, %p84
    %p86 = scmp.ne.s32.totalorder %s74, %s75
    %p87 = scmp.eq.s32.totalorder %s23, 1
    %p88 = por %p86, %p87
    %p90 = scmp.ne.s32.totalorder %s75, %s89
    %p91 = scmp.eq.s32.totalorder %s23, 0
    %p92 = por %p90, %p91
    %s94 = sadd.s32 %s93, 1
    %p97 = scmp.eq.s32.totalorder %s17, 1
    %p98 = scmp.ne.s32.totalorder %s93, %s95
    %p99 = scmp.eq.s32.totalorder %s17, 0
    %p100 = por %p98, %p99
    %p101 = scmp.ne.s32.totalorder %s93, %s95
    %p102 = scmp.eq.s32.totalorder %s22, 1
    %p103 = por %p101, %p102
    %p104 = scmp.ne.s32.totalorder %s95, %s96
    %p105 = scmp.eq.s32.totalorder %s22, 0
    %p106 = por %p104, %p105
    %p107 = scmp.ne.s32.totalorder %s95, %s96
    %p108 = scmp.eq.s32.totalorder %s23, 1
    %p109 = por %p107, %p108
    %p111 = scmp.ne.s32.totalorder %s96, %s110
    %p112 = scmp.eq.s32.totalorder %s23, 0
    %p113 = por %p111, %p112
    %s115 = sadd.s32 %s114, 1
    %p118 = scmp.eq.s32.totalorder %s17, 1
    %p119 = scmp.ne.s32.totalorder %s114, %s116
    %p120 = scmp.eq.s32.totalorder %s17, 0
    %p121 = por %p119, %p120
    %p122 = scmp.ne.s32.totalorder %s114, %s116
    %p123 = scmp.eq.s32.totalorder %s22, 1
    %p124 = por %p122, %p123
    %p125 = scmp.ne.s32.totalorder %s116, %s117
    %p126 = scmp.eq.s32.totalorder %s22, 0
    %p127 = por %p125, %p126
    %p128 = scmp.ne.s32.totalorder %s116, %s117
    %p129 = scmp.eq.s32.totalorder %s23, 1
    %p130 = por %p128, %p129
    %p132 = scmp.ne.s32.totalorder %s117, %s131
    %p133 = scmp.eq.s32.totalorder %s23, 0
    %p134 = por %p132, %p133
    %s136 = sadd.s32 %s135, 1
    %p139 = scmp.eq.s32.totalorder %s17, 1
    %p140 = scmp.ne.s32.totalorder %s135, %s137
    %p141 = scmp.eq.s32.totalorder %s17, 0
    %p142 = por %p140, %p141
    %p143 = scmp.ne.s32.totalorder %s135, %s137
    %p144 = scmp.eq.s32.totalorder %s22, 1
    %p145 = por %p143, %p144
    %p146 = scmp.ne.s32.totalorder %s137, %s138
    %p147 = scmp.eq.s32.totalorder %s22, 0
    %p148 = por %p146, %p147
    %p149 = scmp.ne.s32.totalorder %s137, %s138
    %p150 = scmp.eq.s32.totalorder %s23, 1
    %p151 = por %p149, %p150
    %p153 = scmp.ne.s32.totalorder %s138, %s152
    %p154 = scmp.eq.s32.totalorder %s23, 0
    %p155 = por %p153, %p154
    %s157 = sadd.s32 %s156, 1
    %p160 = scmp.eq.s32.totalorder %s17, 1
    %p161 = scmp.ne.s32.totalorder %s156, %s158
    %p162 = scmp.eq.s32.totalorder %s17, 0
    %p163 = por %p161, %p162
    %p164 = scmp.ne.s32.totalorder %s156, %s158
    %p165 = scmp.eq.s32.totalorder %s22, 1
    %p166 = por %p164, %p165
    %p167 = scmp.ne.s32.totalorder %s158, %s159
    %p168 = scmp.eq.s32.totalorder %s22, 0
    %p169 = por %p167, %p168
    %p170 = scmp.ne.s32.totalorder %s158, %s159
    %p171 = scmp.eq.s32.totalorder %s23, 1
    %p172 = por %p170, %p171
    %p174 = scmp.ne.s32.totalorder %s159, %s173
    %p175 = scmp.eq.s32.totalorder %s23, 0
    %p176 = por %p174, %p175
    %s178 = sadd.s32 %s177, 1
    %p181 = scmp.eq.s32.totalorder %s17, 1
    %p182 = scmp.ne.s32.totalorder %s177, %s179
    %p183 = scmp.eq.s32.totalorder %s17, 0
    %p184 = por %p182, %p183
    %p185 = scmp.ne.s32.totalorder %s177, %s179
    %p186 = scmp.eq.s32.totalorder %s22, 1
    %p187 = por %p185, %p186
    %p188 = scmp.ne.s32.totalorder %s179, %s180
    %p189 = scmp.eq.s32.totalorder %s22, 0
    %p190 = por %p188, %p189
    %p191 = scmp.ne.s32.totalorder %s179, %s180
    %p192 = scmp.eq.s32.totalorder %s23, 1
    %p193 = por %p191, %p192
    %p195 = scmp.ne.s32.totalorder %s180, %s194
    %p196 = scmp.eq.s32.totalorder %s23, 0
    %p197 = por %p195, %p196
    %s199 = sadd.s32 %s198, 1
    %p202 = scmp.eq.s32.totalorder %s17, 1
    %p203 = scmp.ne.s32.totalorder %s198, %s200
    %p204 = scmp.eq.s32.totalorder %s17, 0
    %p205 = por %p203, %p204
    %p206 = scmp.ne.s32.totalorder %s198, %s200
    %p207 = scmp.eq.s32.totalorder %s22, 1
    %p208 = por %p206, %p207
    %p209 = scmp.ne.s32.totalorder %s200, %s201
    %p210 = scmp.eq.s32.totalorder %s22, 0
    %p211 = por %p209, %p210
    %p212 = scmp.ne.s32.totalorder %s200, %s201
    %p213 = scmp.eq.s32.totalorder %s23, 1
    %p214 = por %p212, %p213
    %p216 = scmp.ne.s32.totalorder %s201, %s215
    %p217 = scmp.eq.s32.totalorder %s23, 0
    %p218 = por %p216, %p217
    %s219 = ssub.s32 %s17, %s24
    %p220 = scmp.eq.s32.totalorder %s219, 0
    %s222 = sadd.s32 %s221, 1
    %s223 = scalar_select %p220, %s221, %s222
    %p226 = pneg %p220
    %p227 = scmp.eq.s32.totalorder %s17, 1
    %p228 = por %p226, %p227
    %p229 = scmp.ne.s32.totalorder %s221, %s224
    %p230 = scmp.eq.s32.totalorder %s17, 0
    %p231 = por %p229, %p230
    %p232 = scmp.ne.s32.totalorder %s221, %s224
    %p233 = scmp.eq.s32.totalorder %s22, 1
    %p234 = por %p232, %p233
    %p235 = scmp.ne.s32.totalorder %s224, %s225
    %p236 = scmp.eq.s32.totalorder %s22, 0
    %p237 = por %p235, %p236
    %p238 = scmp.ne.s32.totalorder %s224, %s225
    %p239 = scmp.eq.s32.totalorder %s23, 1
    %p240 = por %p238, %p239
    %p242 = scmp.ne.s32.totalorder %s225, %s241
    %p243 = scmp.eq.s32.totalorder %s23, 0
    %p244 = por %p242, %p243
    %p245 = scmp.le.s32.totalorder 1, %s17
    %p246 = scmp.lt.s32.totalorder %s17, 3
    %p247 = pnand %p245, %p246
    %p248 = pneg %p247
    // Predicated region
    $region9: #{metric_model_forward.1} parent=5 // pred_check
      _
    $region10: #{metric_model_forward.1} parent=5 // pred_check_branch
      %250 = sbr.rel (%p247) target = $region12
    $region11: #{metric_model_forward.1} parent=5 // pred_region
      %s251 = ssub.s32 %s17, 1
      // Predicated region
      $region13: #{metric_model_forward.1} parent=11 // pred_check
        %p252 = pneg %p64
      $region14: #{metric_model_forward.1} parent=11 // pred_check_branch
        %254 = sbr.rel (%p252) target = $region16
      $region15: #{metric_model_forward.1} parent=11 // pred_region
        _
      $region16: #{metric_model_forward.1} parent=11 // pred_fallthru
        _
      // Predicated region
      $region17: #{metric_model_forward.1} parent=11 // pred_check
        %p255 = pneg %p85
      $region18: #{metric_model_forward.1} parent=11 // pred_check_branch
        %257 = sbr.rel (%p255) target = $region20
      $region19: #{metric_model_forward.1} parent=11 // pred_region
        _
      $region20: #{metric_model_forward.1} parent=11 // pred_fallthru
        _
      // Predicated region
      $region21: #{metric_model_forward.1} parent=11 // pred_check
        %p258 = pneg %p106
      $region22: #{metric_model_forward.1} parent=11 // pred_check_branch
        %260 = sbr.rel (%p258) target = $region24
      $region23: #{metric_model_forward.1} parent=11 // pred_region
        _
      $region24: #{metric_model_forward.1} parent=11 // pred_fallthru
        _
      // Predicated region
      $region25: #{metric_model_forward.1} parent=11 // pred_check
        %p261 = pneg %p127
      $region26: #{metric_model_forward.1} parent=11 // pred_check_branch
        %263 = sbr.rel (%p261) target = $region28
      $region27: #{metric_model_forward.1} parent=11 // pred_region
        _
      $region28: #{metric_model_forward.1} parent=11 // pred_fallthru
        _
      // Predicated region
      $region29: #{metric_model_forward.1} parent=11 // pred_check
        %p264 = pneg %p148
      $region30: #{metric_model_forward.1} parent=11 // pred_check_branch
        %266 = sbr.rel (%p264) target = $region32
      $region31: #{metric_model_forward.1} parent=11 // pred_region
        _
      $region32: #{metric_model_forward.1} parent=11 // pred_fallthru
        _
      // Predicated region
      $region33: #{metric_model_forward.1} parent=11 // pred_check
        %p267 = pneg %p169
      $region34: #{metric_model_forward.1} parent=11 // pred_check_branch
        %269 = sbr.rel (%p267) target = $region36
      $region35: #{metric_model_forward.1} parent=11 // pred_region
        _
      $region36: #{metric_model_forward.1} parent=11 // pred_fallthru
        _
      // Predicated region
      $region37: #{metric_model_forward.1} parent=11 // pred_check
        %p270 = pneg %p190
      $region38: #{metric_model_forward.1} parent=11 // pred_check_branch
        %272 = sbr.rel (%p270) target = $region40
      $region39: #{metric_model_forward.1} parent=11 // pred_region
        _
      $region40: #{metric_model_forward.1} parent=11 // pred_fallthru
        _
      // Predicated region
      $region41: #{metric_model_forward.1} parent=11 // pred_check
        %p273 = pneg %p211
      $region42: #{metric_model_forward.1} parent=11 // pred_check_branch
        %275 = sbr.rel (%p273) target = $region44
      $region43: #{metric_model_forward.1} parent=11 // pred_region
        _
      $region44: #{metric_model_forward.1} parent=11 // pred_fallthru
        _
    $region12: #{metric_model_forward.1} parent=5 // pred_fallthru
      _
    %p276 = scmp.lt.s32.totalorder %s17, 2
    // Predicated region
    $region45: #{metric_model_forward.1} parent=5 // pred_check
      %p277 = pneg %p276
    $region46: #{metric_model_forward.1} parent=5 // pred_check_branch
      %279 = sbr.rel (%p277) target = $region48
    $region47: #{metric_model_forward.1} parent=5 // pred_region
      // Predicated region
      $region49: #{metric_model_forward.1} parent=47 // pred_check
        %p280 = pneg %p37
      $region50: #{metric_model_forward.1} parent=47 // pred_check_branch
        %282 = sbr.rel (%p280) target = $region52
      $region51: #{metric_model_forward.1} parent=47 // pred_region
        %p283 = scmp.lt.s32.totalorder %s17, 1
        %s284 = scalar_select %p283, %s17, 1
        %s285 = smul.addr %s284, 300
        %s286 = smul.addr %s285, 4
        %s287 = scalar_lea.vmem %s0, %s286
      $region52: #{metric_model_forward.1} parent=47 // pred_fallthru
        _
    $region48: #{metric_model_forward.1} parent=5 // pred_fallthru
      _
    %p288 = scmp.le.s32.totalorder 1, %s17
    %p289 = scmp.lt.s32.totalorder %s17, 3
    %p290 = pnand %p288, %p289
    %p291 = pneg %p290
    // Predicated region
    $region53: #{metric_model_forward.1} parent=5 // pred_check
      _
    $region54: #{metric_model_forward.1} parent=5 // pred_check_branch
      %293 = sbr.rel (%p290) target = $region56
    $region55: #{metric_model_forward.1} parent=5 // pred_region
      %s294 = ssub.s32 %s17, 1
      %p295 = scmp.lt.s32.totalorder %s22, 1
      %s296 = scalar_select %p295, %s22, 1
      %s297 = smul.addr %s296, 300
      %s298 = smul.addr %s297, 4
      %s299 = scalar_lea.vmem %s0, %s298
      %p300 = pneg %p43
      %p301 = pneg %p40
      %p302 = pneg %p64
      %p303 = pneg %p61
      %p304 = pneg %p85
      %p305 = pneg %p82
      %p306 = pneg %p106
      %p307 = pneg %p103
      %p308 = pneg %p127
      %p309 = pneg %p124
      %p310 = pneg %p148
      %p311 = pneg %p145
      %p312 = pneg %p169
      %p313 = pneg %p166
      %p314 = pneg %p190
      %p315 = pneg %p187
      %p316 = pneg %p211
      %p317 = pneg %p208
      %p318 = pneg %p237
      %p319 = pneg %p234
      %p320 = scmp.lt.s32.totalorder %s22, 1
      %s321 = scalar_select %p320, %s22, 1
      %s322 = scalar_lea.vmem %s9, %s321
      %p323 = scmp.lt.s32.totalorder %s22, 1
      %s324 = scalar_select %p323, %s22, 1
      %s325 = smul.addr %s324, 300
      %s326 = smul.addr %s325, 4
      %s327 = scalar_lea.vmem %s0, %s326
      %p328 = scmp.lt.s32.totalorder %s22, 1
      %s329 = scalar_select %p328, %s22, 1
      %s330 = scalar_lea.vmem %s9, %s329
      %v332 = vld [vmem:[%s1] sm:$0xf]
      %v333 = vld [vmem:[%s1 + $0x4] sm:$0xf]
      %v334 = vld [vmem:[%s1 + $0x8] sm:$0xf]
      %v335 = vld [vmem:[%s1 + $0xc] sm:$0xf]
      %v336 = vld [vmem:[%s1 + $0x10] sm:$0xf]
      %v337 = vld [vmem:[%s1 + $0x14] sm:$0xf]
      %v338 = vld [vmem:[%s1 + $0x18] sm:$0xf]
      %v339 = vld [vmem:[%s1 + $0x1c] sm:$0xf]
      %v340 = vlaneseq
      %v341 = vand.u32 %v340, 127
      %v342 = vld [vmem:[%s327] sm:$0xff]
      %v343 = vld [vmem:[%s327 + $0x8] sm:$0xff]
      %v344 = vld [vmem:[%s327 + $0x10] sm:$0xff]
      %v345 = vld [vmem:[%s327 + $0x18] sm:$0xff]
      %v346 = vld [vmem:[%s327 + $0x20] sm:$0xff]
      %v347 = vld [vmem:[%s327 + $0x28] sm:$0xff]
      %v348 = vld [vmem:[%s327 + $0x30] sm:$0xff]
      %v349 = vld [vmem:[%s327 + $0x38] sm:$0xff]
      %v350 = vld [vmem:[%s327 + $0x40] sm:$0xff]
      %v351 = vld [vmem:[%s327 + $0x48] sm:$0xff]
      %v352 = vld [vmem:[%s327 + $0x50] sm:$0xff]
      %v353 = vld [vmem:[%s327 + $0x58] sm:$0xff]
      %v354 = vld [vmem:[%s327 + $0x60] sm:$0xf]
      %v355 = vld [vmem:[%s327 + $0x64] sm:$0xff]
      %v356 = vld [vmem:[%s327 + $0x6c] sm:$0xff]
      %v357 = vld [vmem:[%s327 + $0x74] sm:$0xff]
      %v358 = vld [vmem:[%s327 + $0x7c] sm:$0xff]
      %v359 = vld [vmem:[%s327 + $0x84] sm:$0xff]
      %v360 = vld [vmem:[%s327 + $0x8c] sm:$0xff]
      %v361 = vld [vmem:[%s327 + $0x94] sm:$0xff]
      %v362 = vld [vmem:[%s327 + $0x9c] sm:$0xff]
      %v363 = vld [vmem:[%s327 + $0xa4] sm:$0xff]
      %v364 = vld [vmem:[%s327 + $0xac] sm:$0xff]
      %v365 = vld [vmem:[%s327 + $0xb4] sm:$0xff]
      %v366 = vld [vmem:[%s327 + $0xbc] sm:$0xff]
      %v367 = vld [vmem:[%s327 + $0xc4] sm:$0xf]
      %v368 = vld [vmem:[%s327 + $0xc8] sm:$0xff]
      %v369 = vld [vmem:[%s327 + $0xd0] sm:$0xff]
      %v370 = vld [vmem:[%s327 + $0xd8] sm:$0xff]
      %v371 = vld [vmem:[%s327 + $0xe0] sm:$0xff]
      %v372 = vld [vmem:[%s327 + $0xe8] sm:$0xff]
      %v373 = vld [vmem:[%s327 + $0xf0] sm:$0xff]
      %v374 = vld [vmem:[%s327 + $0xf8] sm:$0xff]
      %v375 = vld [vmem:[%s327 + $0x100] sm:$0xff]
      %v376 = vld [vmem:[%s327 + $0x108] sm:$0xff]
      %v377 = vld [vmem:[%s327 + $0x110] sm:$0xff]
      %v378 = vld [vmem:[%s327 + $0x118] sm:$0xff]
      %v379 = vld [vmem:[%s327 + $0x120] sm:$0xff]
      %v380 = vld [vmem:[%s327 + $0x128] sm:$0xf]
      %v381 = vld [vmem:[%s327 + $0x12c] sm:$0xff]
      %v382 = vld [vmem:[%s327 + $0x134] sm:$0xff]
      %v383 = vld [vmem:[%s327 + $0x13c] sm:$0xff]
      %v384 = vld [vmem:[%s327 + $0x144] sm:$0xff]
      %v385 = vld [vmem:[%s327 + $0x14c] sm:$0xff]
      %v386 = vld [vmem:[%s327 + $0x154] sm:$0xff]
      %v387 = vld [vmem:[%s327 + $0x15c] sm:$0xff]
      %v388 = vld [vmem:[%s327 + $0x164] sm:$0xff]
      %v389 = vld [vmem:[%s327 + $0x16c] sm:$0xff]
      %v390 = vld [vmem:[%s327 + $0x174] sm:$0xff]
      %v391 = vld [vmem:[%s327 + $0x17c] sm:$0xff]
      %v392 = vld [vmem:[%s327 + $0x184] sm:$0xff]
      %v393 = vld [vmem:[%s327 + $0x18c] sm:$0xf]
      %v394 = vld [vmem:[%s327 + $0x190] sm:$0xff]
      %v395 = vld [vmem:[%s327 + $0x198] sm:$0xff]
      %v396 = vld [vmem:[%s327 + $0x1a0] sm:$0xff]
      %v397 = vld [vmem:[%s327 + $0x1a8] sm:$0xff]
      %v398 = vld [vmem:[%s327 + $0x1b0] sm:$0xff]
      %v399 = vld [vmem:[%s327 + $0x1b8] sm:$0xff]
      %v400 = vld [vmem:[%s327 + $0x1c0] sm:$0xff]
      %v401 = vld [vmem:[%s327 + $0x1c8] sm:$0xff]
      %v402 = vld [vmem:[%s327 + $0x1d0] sm:$0xff]
      %v403 = vld [vmem:[%s327 + $0x1d8] sm:$0xff]
      %v404 = vld [vmem:[%s327 + $0x1e0] sm:$0xff]
      %v405 = vld [vmem:[%s327 + $0x1e8] sm:$0xff]
      %v406 = vld [vmem:[%s327 + $0x1f0] sm:$0xf]
      %v407 = vld [vmem:[%s327 + $0x1f4] sm:$0xff]
      %v408 = vld [vmem:[%s327 + $0x1fc] sm:$0xff]
      %v409 = vld [vmem:[%s327 + $0x204] sm:$0xff]
      %v410 = vld [vmem:[%s327 + $0x20c] sm:$0xff]
      %v411 = vld [vmem:[%s327 + $0x214] sm:$0xff]
      %v412 = vld [vmem:[%s327 + $0x21c] sm:$0xff]
      %v413 = vld [vmem:[%s327 + $0x224] sm:$0xff]
      %v414 = vld [vmem:[%s327 + $0x22c] sm:$0xff]
      %v415 = vld [vmem:[%s327 + $0x234] sm:$0xff]
      %v416 = vld [vmem:[%s327 + $0x23c] sm:$0xff]
      %v417 = vld [vmem:[%s327 + $0x244] sm:$0xff]
      %v418 = vld [vmem:[%s327 + $0x24c] sm:$0xff]
      %v419 = vld [vmem:[%s327 + $0x254] sm:$0xf]
      %v420 = vld [vmem:[%s327 + $0x258] sm:$0xff]
      %v421 = vld [vmem:[%s327 + $0x260] sm:$0xff]
      %v422 = vld [vmem:[%s327 + $0x268] sm:$0xff]
      %v423 = vld [vmem:[%s327 + $0x270] sm:$0xff]
      %v424 = vld [vmem:[%s327 + $0x278] sm:$0xff]
      %v425 = vld [vmem:[%s327 + $0x280] sm:$0xff]
      %v426 = vld [vmem:[%s327 + $0x288] sm:$0xff]
      %v427 = vld [vmem:[%s327 + $0x290] sm:$0xff]
      %v428 = vld [vmem:[%s327 + $0x298] sm:$0xff]
      %v429 = vld [vmem:[%s327 + $0x2a0] sm:$0xff]
      %v430 = vld [vmem:[%s327 + $0x2a8] sm:$0xff]
      %v431 = vld [vmem:[%s327 + $0x2b0] sm:$0xff]
      %v432 = vld [vmem:[%s327 + $0x2b8] sm:$0xf]
      %v433 = vld [vmem:[%s327 + $0x2bc] sm:$0xff]
      %v434 = vld [vmem:[%s327 + $0x2c4] sm:$0xff]
      %v435 = vld [vmem:[%s327 + $0x2cc] sm:$0xff]
      %v436 = vld [vmem:[%s327 + $0x2d4] sm:$0xff]
      %v437 = vld [vmem:[%s327 + $0x2dc] sm:$0xff]
      %v438 = vld [vmem:[%s327 + $0x2e4] sm:$0xff]
      %v439 = vld [vmem:[%s327 + $0x2ec] sm:$0xff]
      %v440 = vld [vmem:[%s327 + $0x2f4] sm:$0xff]
      %v441 = vld [vmem:[%s327 + $0x2fc] sm:$0xff]
      %v442 = vld [vmem:[%s327 + $0x304] sm:$0xff]
      %v443 = vld [vmem:[%s327 + $0x30c] sm:$0xff]
      %v444 = vld [vmem:[%s327 + $0x314] sm:$0xff]
      %v445 = vld [vmem:[%s327 + $0x31c] sm:$0xf]
      %v446 = vld [vmem:[%s327 + $0x320] sm:$0xff]
      %v447 = vld [vmem:[%s327 + $0x328] sm:$0xff]
      %v448 = vld [vmem:[%s327 + $0x330] sm:$0xff]
      %v449 = vld [vmem:[%s327 + $0x338] sm:$0xff]
      %v450 = vld [vmem:[%s327 + $0x340] sm:$0xff]
      %v451 = vld [vmem:[%s327 + $0x348] sm:$0xff]
      %v452 = vld [vmem:[%s327 + $0x350] sm:$0xff]
      %v453 = vld [vmem:[%s327 + $0x358] sm:$0xff]
      %v454 = vld [vmem:[%s327 + $0x360] sm:$0xff]
      %v455 = vld [vmem:[%s327 + $0x368] sm:$0xff]
      %v456 = vld [vmem:[%s327 + $0x370] sm:$0xff]
      %v457 = vld [vmem:[%s327 + $0x378] sm:$0xff]
      %v458 = vld [vmem:[%s327 + $0x380] sm:$0xf]
      %v459 = vld [vmem:[%s327 + $0x384] sm:$0xff]
      %v460 = vld [vmem:[%s327 + $0x38c] sm:$0xff]
      %v461 = vld [vmem:[%s327 + $0x394] sm:$0xff]
      %v462 = vld [vmem:[%s327 + $0x39c] sm:$0xff]
      %v463 = vld [vmem:[%s327 + $0x3a4] sm:$0xff]
      %v464 = vld [vmem:[%s327 + $0x3ac] sm:$0xff]
      %v465 = vld [vmem:[%s327 + $0x3b4] sm:$0xff]
      %v466 = vld [vmem:[%s327 + $0x3bc] sm:$0xff]
      %v467 = vld [vmem:[%s327 + $0x3c4] sm:$0xff]
      %v468 = vld [vmem:[%s327 + $0x3cc] sm:$0xff]
      %v469 = vld [vmem:[%s327 + $0x3d4] sm:$0xff]
      %v470 = vld [vmem:[%s327 + $0x3dc] sm:$0xff]
      %v471 = vld [vmem:[%s327 + $0x3e4] sm:$0xf]
      %v472 = vld [vmem:[%s327 + $0x3e8] sm:$0xff]
      %v473 = vld [vmem:[%s327 + $0x3f0] sm:$0xff]
      %v474 = vld [vmem:[%s327 + $0x3f8] sm:$0xff]
      %v475 = vld [vmem:[%s327 + $0x400] sm:$0xff]
      %v476 = vld [vmem:[%s327 + $0x408] sm:$0xff]
      %v477 = vld [vmem:[%s327 + $0x410] sm:$0xff]
      %v478 = vld [vmem:[%s327 + $0x418] sm:$0xff]
      %v479 = vld [vmem:[%s327 + $0x420] sm:$0xff]
      %v480 = vld [vmem:[%s327 + $0x428] sm:$0xff]
      %v481 = vld [vmem:[%s327 + $0x430] sm:$0xff]
      %v482 = vld [vmem:[%s327 + $0x438] sm:$0xff]
      %v483 = vld [vmem:[%s327 + $0x440] sm:$0xff]
      %v484 = vld [vmem:[%s327 + $0x448] sm:$0xf]
      %v485 = vld [vmem:[%s327 + $0x44c] sm:$0xff]
      %v486 = vld [vmem:[%s327 + $0x454] sm:$0xff]
      %v487 = vld [vmem:[%s327 + $0x45c] sm:$0xff]
      %v488 = vld [vmem:[%s327 + $0x464] sm:$0xff]
      %v489 = vld [vmem:[%s327 + $0x46c] sm:$0xff]
      %v490 = vld [vmem:[%s327 + $0x474] sm:$0xff]
      %v491 = vld [vmem:[%s327 + $0x47c] sm:$0xff]
      %v492 = vld [vmem:[%s327 + $0x484] sm:$0xff]
      %v493 = vld [vmem:[%s327 + $0x48c] sm:$0xff]
      %v494 = vld [vmem:[%s327 + $0x494] sm:$0xff]
      %v495 = vld [vmem:[%s327 + $0x49c] sm:$0xff]
      %v496 = vld [vmem:[%s327 + $0x4a4] sm:$0xff]
      %v497 = vld [vmem:[%s327 + $0x4ac] sm:$0xf]
      %v506 = vunpack.c.l.b16 %v332
      %v507 = vunpack.c.l.b16 %v333
      %v508 = vunpack.c.l.b16 %v334
      %v509 = vunpack.c.l.b16 %v335
      %v510 = vunpack.c.l.b16 %v336
      %v511 = vunpack.c.l.b16 %v337
      %v512 = vunpack.c.l.b16 %v338
      %v513 = vunpack.c.l.b16 %v339
      %v514 = vpack.c.b16 %v507, %v506
      %v515 = vpack.c.b16 %v509, %v508
      %v516 = vpack.c.b16 %v511, %v510
      %v517 = vpack.c.b16 %v513, %v512
      %v674 = vunpack.c.l.b16 %v342
      %v675 = vunpack.c.h.b16 %v342
      %v676 = vunpack.c.l.b16 %v343
      %v677 = vunpack.c.h.b16 %v343
      %v678 = vunpack.c.l.b16 %v344
      %v679 = vunpack.c.h.b16 %v344
      %v680 = vunpack.c.l.b16 %v345
      %v681 = vunpack.c.h.b16 %v345
      %v682 = vunpack.c.l.b16 %v346
      %v683 = vunpack.c.h.b16 %v346
      %v684 = vunpack.c.l.b16 %v347
      %v685 = vunpack.c.h.b16 %v347
      %v686 = vunpack.c.l.b16 %v348
      %v687 = vunpack.c.h.b16 %v348
      %v688 = vunpack.c.l.b16 %v349
      %v689 = vunpack.c.h.b16 %v349
      %v690 = vunpack.c.l.b16 %v350
      %v691 = vunpack.c.h.b16 %v350
      %v692 = vunpack.c.l.b16 %v351
      %v693 = vunpack.c.h.b16 %v351
      %v694 = vunpack.c.l.b16 %v352
      %v695 = vunpack.c.h.b16 %v352
      %v696 = vunpack.c.l.b16 %v353
      %v697 = vunpack.c.h.b16 %v353
      %v698 = vunpack.c.l.b16 %v354
      %v699 = vunpack.c.l.b16 %v355
      %v700 = vunpack.c.h.b16 %v355
      %v701 = vunpack.c.l.b16 %v356
      %v702 = vunpack.c.h.b16 %v356
      %v703 = vunpack.c.l.b16 %v357
      %v704 = vunpack.c.h.b16 %v357
      %v705 = vunpack.c.l.b16 %v358
      %v706 = vunpack.c.h.b16 %v358
      %v707 = vunpack.c.l.b16 %v359
      %v708 = vunpack.c.h.b16 %v359
      %v709 = vunpack.c.l.b16 %v360
      %v710 = vunpack.c.h.b16 %v360
      %v711 = vunpack.c.l.b16 %v361
      %v712 = vunpack.c.h.b16 %v361
      %v713 = vunpack.c.l.b16 %v362
      %v714 = vunpack.c.h.b16 %v362
      %v715 = vunpack.c.l.b16 %v363
      %v716 = vunpack.c.h.b16 %v363
      %v717 = vunpack.c.l.b16 %v364
      %v718 = vunpack.c.h.b16 %v364
      %v719 = vunpack.c.l.b16 %v365
      %v720 = vunpack.c.h.b16 %v365
      %v721 = vunpack.c.l.b16 %v366
      %v722 = vunpack.c.h.b16 %v366
      %v723 = vunpack.c.l.b16 %v367
      %v724 = vunpack.c.l.b16 %v368
      %v725 = vunpack.c.h.b16 %v368
      %v726 = vunpack.c.l.b16 %v369
      %v727 = vunpack.c.h.b16 %v369
      %v728 = vunpack.c.l.b16 %v370
      %v729 = vunpack.c.h.b16 %v370
      %v730 = vunpack.c.l.b16 %v371
      %v731 = vunpack.c.h.b16 %v371
      %v732 = vunpack.c.l.b16 %v372
      %v733 = vunpack.c.h.b16 %v372
      %v734 = vunpack.c.l.b16 %v373
      %v735 = vunpack.c.h.b16 %v373
      %v736 = vunpack.c.l.b16 %v374
      %v737 = vunpack.c.h.b16 %v374
      %v738 = vunpack.c.l.b16 %v375
      %v739 = vunpack.c.h.b16 %v375
      %v740 = vunpack.c.l.b16 %v376
      %v741 = vunpack.c.h.b16 %v376
      %v742 = vunpack.c.l.b16 %v377
      %v743 = vunpack.c.h.b16 %v377
      %v744 = vunpack.c.l.b16 %v378
      %v745 = vunpack.c.h.b16 %v378
      %v746 = vunpack.c.l.b16 %v379
      %v747 = vunpack.c.h.b16 %v379
      %v748 = vunpack.c.l.b16 %v380
      %v749 = vunpack.c.l.b16 %v381
      %v750 = vunpack.c.h.b16 %v381
      %v751 = vunpack.c.l.b16 %v382
      %v752 = vunpack.c.h.b16 %v382
      %v753 = vunpack.c.l.b16 %v383
      %v754 = vunpack.c.h.b16 %v383
      %v755 = vunpack.c.l.b16 %v384
      %v756 = vunpack.c.h.b16 %v384
      %v757 = vunpack.c.l.b16 %v385
      %v758 = vunpack.c.h.b16 %v385
      %v759 = vunpack.c.l.b16 %v386
      %v760 = vunpack.c.h.b16 %v386
      %v761 = vunpack.c.l.b16 %v387
      %v762 = vunpack.c.h.b16 %v387
      %v763 = vunpack.c.l.b16 %v388
      %v764 = vunpack.c.h.b16 %v388
      %v765 = vunpack.c.l.b16 %v389
      %v766 = vunpack.c.h.b16 %v389
      %v767 = vunpack.c.l.b16 %v390
      %v768 = vunpack.c.h.b16 %v390
      %v769 = vunpack.c.l.b16 %v391
      %v770 = vunpack.c.h.b16 %v391
      %v771 = vunpack.c.l.b16 %v392
      %v772 = vunpack.c.h.b16 %v392
      %v773 = vunpack.c.l.b16 %v393
      %v774 = vunpack.c.l.b16 %v394
      %v775 = vunpack.c.h.b16 %v394
      %v776 = vunpack.c.l.b16 %v395
      %v777 = vunpack.c.h.b16 %v395
      %v778 = vunpack.c.l.b16 %v396
      %v779 = vunpack.c.h.b16 %v396
      %v780 = vunpack.c.l.b16 %v397
      %v781 = vunpack.c.h.b16 %v397
      %v782 = vunpack.c.l.b16 %v398
      %v783 = vunpack.c.h.b16 %v398
      %v784 = vunpack.c.l.b16 %v399
      %v785 = vunpack.c.h.b16 %v399
      %v786 = vunpack.c.l.b16 %v400
      %v787 = vunpack.c.h.b16 %v400
      %v788 = vunpack.c.l.b16 %v401
      %v789 = vunpack.c.h.b16 %v401
      %v790 = vunpack.c.l.b16 %v402
      %v791 = vunpack.c.h.b16 %v402
      %v792 = vunpack.c.l.b16 %v403
      %v793 = vunpack.c.h.b16 %v403
      %v794 = vunpack.c.l.b16 %v404
      %v795 = vunpack.c.h.b16 %v404
      %v796 = vunpack.c.l.b16 %v405
      %v797 = vunpack.c.h.b16 %v405
      %v798 = vunpack.c.l.b16 %v406
      %v799 = vunpack.c.l.b16 %v407
      %v800 = vunpack.c.h.b16 %v407
      %v801 = vunpack.c.l.b16 %v408
      %v802 = vunpack.c.h.b16 %v408
      %v803 = vunpack.c.l.b16 %v409
      %v804 = vunpack.c.h.b16 %v409
      %v805 = vunpack.c.l.b16 %v410
      %v806 = vunpack.c.h.b16 %v410
      %v807 = vunpack.c.l.b16 %v411
      %v808 = vunpack.c.h.b16 %v411
      %v809 = vunpack.c.l.b16 %v412
      %v810 = vunpack.c.h.b16 %v412
      %v811 = vunpack.c.l.b16 %v413
      %v812 = vunpack.c.h.b16 %v413
      %v813 = vunpack.c.l.b16 %v414
      %v814 = vunpack.c.h.b16 %v414
      %v815 = vunpack.c.l.b16 %v415
      %v816 = vunpack.c.h.b16 %v415
      %v817 = vunpack.c.l.b16 %v416
      %v818 = vunpack.c.h.b16 %v416
      %v819 = vunpack.c.l.b16 %v417
      %v820 = vunpack.c.h.b16 %v417
      %v821 = vunpack.c.l.b16 %v418
      %v822 = vunpack.c.h.b16 %v418
      %v823 = vunpack.c.l.b16 %v419
      %v824 = vunpack.c.l.b16 %v420
      %v825 = vunpack.c.h.b16 %v420
      %v826 = vunpack.c.l.b16 %v421
      %v827 = vunpack.c.h.b16 %v421
      %v828 = vunpack.c.l.b16 %v422
      %v829 = vunpack.c.h.b16 %v422
      %v830 = vunpack.c.l.b16 %v423
      %v831 = vunpack.c.h.b16 %v423
      %v832 = vunpack.c.l.b16 %v424
      %v833 = vunpack.c.h.b16 %v424
      %v834 = vunpack.c.l.b16 %v425
      %v835 = vunpack.c.h.b16 %v425
      %v836 = vunpack.c.l.b16 %v426
      %v837 = vunpack.c.h.b16 %v426
      %v838 = vunpack.c.l.b16 %v427
      %v839 = vunpack.c.h.b16 %v427
      %v840 = vunpack.c.l.b16 %v428
      %v841 = vunpack.c.h.b16 %v428
      %v842 = vunpack.c.l.b16 %v429
      %v843 = vunpack.c.h.b16 %v429
      %v844 = vunpack.c.l.b16 %v430
      %v845 = vunpack.c.h.b16 %v430
      %v846 = vunpack.c.l.b16 %v431
      %v847 = vunpack.c.h.b16 %v431
      %v848 = vunpack.c.l.b16 %v432
      %v849 = vunpack.c.l.b16 %v433
      %v850 = vunpack.c.h.b16 %v433
      %v851 = vunpack.c.l.b16 %v434
      %v852 = vunpack.c.h.b16 %v434
      %v853 = vunpack.c.l.b16 %v435
      %v854 = vunpack.c.h.b16 %v435
      %v855 = vunpack.c.l.b16 %v436
      %v856 = vunpack.c.h.b16 %v436
      %v857 = vunpack.c.l.b16 %v437
      %v858 = vunpack.c.h.b16 %v437
      %v859 = vunpack.c.l.b16 %v438
      %v860 = vunpack.c.h.b16 %v438
      %v861 = vunpack.c.l.b16 %v439
      %v862 = vunpack.c.h.b16 %v439
      %v863 = vunpack.c.l.b16 %v440
      %v864 = vunpack.c.h.b16 %v440
      %v865 = vunpack.c.l.b16 %v441
      %v866 = vunpack.c.h.b16 %v441
      %v867 = vunpack.c.l.b16 %v442
      %v868 = vunpack.c.h.b16 %v442
      %v869 = vunpack.c.l.b16 %v443
      %v870 = vunpack.c.h.b16 %v443
      %v871 = vunpack.c.l.b16 %v444
      %v872 = vunpack.c.h.b16 %v444
      %v873 = vunpack.c.l.b16 %v445
      %v874 = vunpack.c.l.b16 %v446
      %v875 = vunpack.c.h.b16 %v446
      %v876 = vunpack.c.l.b16 %v447
      %v877 = vunpack.c.h.b16 %v447
      %v878 = vunpack.c.l.b16 %v448
      %v879 = vunpack.c.h.b16 %v448
      %v880 = vunpack.c.l.b16 %v449
      %v881 = vunpack.c.h.b16 %v449
      %v882 = vunpack.c.l.b16 %v450
      %v883 = vunpack.c.h.b16 %v450
      %v884 = vunpack.c.l.b16 %v451
      %v885 = vunpack.c.h.b16 %v451
      %v886 = vunpack.c.l.b16 %v452
      %v887 = vunpack.c.h.b16 %v452
      %v888 = vunpack.c.l.b16 %v453
      %v889 = vunpack.c.h.b16 %v453
      %v890 = vunpack.c.l.b16 %v454
      %v891 = vunpack.c.h.b16 %v454
      %v892 = vunpack.c.l.b16 %v455
      %v893 = vunpack.c.h.b16 %v455
      %v894 = vunpack.c.l.b16 %v456
      %v895 = vunpack.c.h.b16 %v456
      %v896 = vunpack.c.l.b16 %v457
      %v897 = vunpack.c.h.b16 %v457
      %v898 = vunpack.c.l.b16 %v458
      %v899 = vunpack.c.l.b16 %v459
      %v900 = vunpack.c.h.b16 %v459
      %v901 = vunpack.c.l.b16 %v460
      %v902 = vunpack.c.h.b16 %v460
      %v903 = vunpack.c.l.b16 %v461
      %v904 = vunpack.c.h.b16 %v461
      %v905 = vunpack.c.l.b16 %v462
      %v906 = vunpack.c.h.b16 %v462
      %v907 = vunpack.c.l.b16 %v463
      %v908 = vunpack.c.h.b16 %v463
      %v909 = vunpack.c.l.b16 %v464
      %v910 = vunpack.c.h.b16 %v464
      %v911 = vunpack.c.l.b16 %v465
      %v912 = vunpack.c.h.b16 %v465
      %v913 = vunpack.c.l.b16 %v466
      %v914 = vunpack.c.h.b16 %v466
      %v915 = vunpack.c.l.b16 %v467
      %v916 = vunpack.c.h.b16 %v467
      %v917 = vunpack.c.l.b16 %v468
      %v918 = vunpack.c.h.b16 %v468
      %v919 = vunpack.c.l.b16 %v469
      %v920 = vunpack.c.h.b16 %v469
      %v921 = vunpack.c.l.b16 %v470
      %v922 = vunpack.c.h.b16 %v470
      %v923 = vunpack.c.l.b16 %v471
      %v924 = vunpack.c.l.b16 %v472
      %v925 = vunpack.c.h.b16 %v472
      %v926 = vunpack.c.l.b16 %v473
      %v927 = vunpack.c.h.b16 %v473
      %v928 = vunpack.c.l.b16 %v474
      %v929 = vunpack.c.h.b16 %v474
      %v930 = vunpack.c.l.b16 %v475
      %v931 = vunpack.c.h.b16 %v475
      %v932 = vunpack.c.l.b16 %v476
      %v933 = vunpack.c.h.b16 %v476
      %v934 = vunpack.c.l.b16 %v477
      %v935 = vunpack.c.h.b16 %v477
      %v936 = vunpack.c.l.b16 %v478
      %v937 = vunpack.c.h.b16 %v478
      %v938 = vunpack.c.l.b16 %v479
      %v939 = vunpack.c.h.b16 %v479
      %v940 = vunpack.c.l.b16 %v480
      %v941 = vunpack.c.h.b16 %v480
      %v942 = vunpack.c.l.b16 %v481
      %v943 = vunpack.c.h.b16 %v481
      %v944 = vunpack.c.l.b16 %v482
      %v945 = vunpack.c.h.b16 %v482
      %v946 = vunpack.c.l.b16 %v483
      %v947 = vunpack.c.h.b16 %v483
      %v948 = vunpack.c.l.b16 %v484
      %v949 = vunpack.c.l.b16 %v485
      %v950 = vunpack.c.h.b16 %v485
      %v951 = vunpack.c.l.b16 %v486
      %v952 = vunpack.c.h.b16 %v486
      %v953 = vunpack.c.l.b16 %v487
      %v954 = vunpack.c.h.b16 %v487
      %v955 = vunpack.c.l.b16 %v488
      %v956 = vunpack.c.h.b16 %v488
      %v957 = vunpack.c.l.b16 %v489
      %v958 = vunpack.c.h.b16 %v489
      %v959 = vunpack.c.l.b16 %v490
      %v960 = vunpack.c.h.b16 %v490
      %v961 = vunpack.c.l.b16 %v491
      %v962 = vunpack.c.h.b16 %v491
      %v963 = vunpack.c.l.b16 %v492
      %v964 = vunpack.c.h.b16 %v492
      %v965 = vunpack.c.l.b16 %v493
      %v966 = vunpack.c.h.b16 %v493
      %v967 = vunpack.c.l.b16 %v494
      %v968 = vunpack.c.h.b16 %v494
      %v969 = vunpack.c.l.b16 %v495
      %v970 = vunpack.c.h.b16 %v495
      %v971 = vunpack.c.l.b16 %v496
      %v972 = vunpack.c.h.b16 %v496
      %v973 = vunpack.c.l.b16 %v497
      %v974 = vpack.c.b16 %v699, %v674
      %v975 = vpack.c.b16 %v700, %v675
      %v976 = vpack.c.b16 %v701, %v676
      %v977 = vpack.c.b16 %v702, %v677
      %v978 = vpack.c.b16 %v703, %v678
      %v979 = vpack.c.b16 %v704, %v679
      %v980 = vpack.c.b16 %v705, %v680
      %v981 = vpack.c.b16 %v706, %v681
      %v982 = vpack.c.b16 %v707, %v682
      %v983 = vpack.c.b16 %v708, %v683
      %v984 = vpack.c.b16 %v709, %v684
      %v985 = vpack.c.b16 %v710, %v685
      %v986 = vpack.c.b16 %v711, %v686
      %v987 = vpack.c.b16 %v712, %v687
      %v988 = vpack.c.b16 %v713, %v688
      %v989 = vpack.c.b16 %v714, %v689
      %v990 = vpack.c.b16 %v715, %v690
      %v991 = vpack.c.b16 %v716, %v691
      %v992 = vpack.c.b16 %v717, %v692
      %v993 = vpack.c.b16 %v718, %v693
      %v994 = vpack.c.b16 %v719, %v694
      %v995 = vpack.c.b16 %v720, %v695
      %v996 = vpack.c.b16 %v721, %v696
      %v997 = vpack.c.b16 %v722, %v697
      %v998 = vpack.c.b16 %v723, %v698
      %v999 = vpack.c.b16 %v749, %v724
      %v1000 = vpack.c.b16 %v750, %v725
      %v1001 = vpack.c.b16 %v751, %v726
      %v1002 = vpack.c.b16 %v752, %v727
      %v1003 = vpack.c.b16 %v753, %v728
      %v1004 = vpack.c.b16 %v754, %v729
      %v1005 = vpack.c.b16 %v755, %v730
      %v1006 = vpack.c.b16 %v756, %v731
      %v1007 = vpack.c.b16 %v757, %v732
      %v1008 = vpack.c.b16 %v758, %v733
      %v1009 = vpack.c.b16 %v759, %v734
      %v1010 = vpack.c.b16 %v760, %v735
      %v1011 = vpack.c.b16 %v761, %v736
      %v1012 = vpack.c.b16 %v762, %v737
      %v1013 = vpack.c.b16 %v763, %v738
      %v1014 = vpack.c.b16 %v764, %v739
      %v1015 = vpack.c.b16 %v765, %v740
      %v1016 = vpack.c.b16 %v766, %v741
      %v1017 = vpack.c.b16 %v767, %v742
      %v1018 = vpack.c.b16 %v768, %v743
      %v1019 = vpack.c.b16 %v769, %v744
      %v1020 = vpack.c.b16 %v770, %v745
      %v1021 = vpack.c.b16 %v771, %v746
      %v1022 = vpack.c.b16 %v772, %v747
      %v1023 = vpack.c.b16 %v773, %v748
      %v1024 = vpack.c.b16 %v799, %v774
      %v1025 = vpack.c.b16 %v800, %v775
      %v1026 = vpack.c.b16 %v801, %v776
      %v1027 = vpack.c.b16 %v802, %v777
      %v1028 = vpack.c.b16 %v803, %v778
      %v1029 = vpack.c.b16 %v804, %v779
      %v1030 = vpack.c.b16 %v805, %v780
      %v1031 = vpack.c.b16 %v806, %v781
      %v1032 = vpack.c.b16 %v807, %v782
      %v1033 = vpack.c.b16 %v808, %v783
      %v1034 = vpack.c.b16 %v809, %v784
      %v1035 = vpack.c.b16 %v810, %v785
      %v1036 = vpack.c.b16 %v811, %v786
      %v1037 = vpack.c.b16 %v812, %v787
      %v1038 = vpack.c.b16 %v813, %v788
      %v1039 = vpack.c.b16 %v814, %v789
      %v1040 = vpack.c.b16 %v815, %v790
      %v1041 = vpack.c.b16 %v816, %v791
      %v1042 = vpack.c.b16 %v817, %v792
      %v1043 = vpack.c.b16 %v818, %v793
      %v1044 = vpack.c.b16 %v819, %v794
      %v1045 = vpack.c.b16 %v820, %v795
      %v1046 = vpack.c.b16 %v821, %v796
      %v1047 = vpack.c.b16 %v822, %v797
      %v1048 = vpack.c.b16 %v823, %v798
      %v1049 = vpack.c.b16 %v849, %v824
      %v1050 = vpack.c.b16 %v850, %v825
      %v1051 = vpack.c.b16 %v851, %v826
      %v1052 = vpack.c.b16 %v852, %v827
      %v1053 = vpack.c.b16 %v853, %v828
      %v1054 = vpack.c.b16 %v854, %v829
      %v1055 = vpack.c.b16 %v855, %v830
      %v1056 = vpack.c.b16 %v856, %v831
      %v1057 = vpack.c.b16 %v857, %v832
      %v1058 = vpack.c.b16 %v858, %v833
      %v1059 = vpack.c.b16 %v859, %v834
      %v1060 = vpack.c.b16 %v860, %v835
      %v1061 = vpack.c.b16 %v861, %v836
      %v1062 = vpack.c.b16 %v862, %v837
      %v1063 = vpack.c.b16 %v863, %v838
      %v1064 = vpack.c.b16 %v864, %v839
      %v1065 = vpack.c.b16 %v865, %v840
      %v1066 = vpack.c.b16 %v866, %v841
      %v1067 = vpack.c.b16 %v867, %v842
      %v1068 = vpack.c.b16 %v868, %v843
      %v1069 = vpack.c.b16 %v869, %v844
      %v1070 = vpack.c.b16 %v870, %v845
      %v1071 = vpack.c.b16 %v871, %v846
      %v1072 = vpack.c.b16 %v872, %v847
      %v1073 = vpack.c.b16 %v873, %v848
      %v1074 = vpack.c.b16 %v899, %v874
      %v1075 = vpack.c.b16 %v900, %v875
      %v1076 = vpack.c.b16 %v901, %v876
      %v1077 = vpack.c.b16 %v902, %v877
      %v1078 = vpack.c.b16 %v903, %v878
      %v1079 = vpack.c.b16 %v904, %v879
      %v1080 = vpack.c.b16 %v905, %v880
      %v1081 = vpack.c.b16 %v906, %v881
      %v1082 = vpack.c.b16 %v907, %v882
      %v1083 = vpack.c.b16 %v908, %v883
      %v1084 = vpack.c.b16 %v909, %v884
      %v1085 = vpack.c.b16 %v910, %v885
      %v1086 = vpack.c.b16 %v911, %v886
      %v1087 = vpack.c.b16 %v912, %v887
      %v1088 = vpack.c.b16 %v913, %v888
      %v1089 = vpack.c.b16 %v914, %v889
      %v1090 = vpack.c.b16 %v915, %v890
      %v1091 = vpack.c.b16 %v916, %v891
      %v1092 = vpack.c.b16 %v917, %v892
      %v1093 = vpack.c.b16 %v918, %v893
      %v1094 = vpack.c.b16 %v919, %v894
      %v1095 = vpack.c.b16 %v920, %v895
      %v1096 = vpack.c.b16 %v921, %v896
      %v1097 = vpack.c.b16 %v922, %v897
      %v1098 = vpack.c.b16 %v923, %v898
      %v1099 = vpack.c.b16 %v949, %v924
      %v1100 = vpack.c.b16 %v950, %v925
      %v1101 = vpack.c.b16 %v951, %v926
      %v1102 = vpack.c.b16 %v952, %v927
      %v1103 = vpack.c.b16 %v953, %v928
      %v1104 = vpack.c.b16 %v954, %v929
      %v1105 = vpack.c.b16 %v955, %v930
      %v1106 = vpack.c.b16 %v956, %v931
      %v1107 = vpack.c.b16 %v957, %v932
      %v1108 = vpack.c.b16 %v958, %v933
      %v1109 = vpack.c.b16 %v959, %v934
      %v1110 = vpack.c.b16 %v960, %v935
      %v1111 = vpack.c.b16 %v961, %v936
      %v1112 = vpack.c.b16 %v962, %v937
      %v1113 = vpack.c.b16 %v963, %v938
      %v1114 = vpack.c.b16 %v964, %v939
      %v1115 = vpack.c.b16 %v965, %v940
      %v1116 = vpack.c.b16 %v966, %v941
      %v1117 = vpack.c.b16 %v967, %v942
      %v1118 = vpack.c.b16 %v968, %v943
      %v1119 = vpack.c.b16 %v969, %v944
      %v1120 = vpack.c.b16 %v970, %v945
      %v1121 = vpack.c.b16 %v971, %v946
      %v1122 = vpack.c.b16 %v972, %v947
      %v1123 = vpack.c.b16 %v973, %v948
      %vm1274 = vcmask 785408
      %v1276 = vsel %vm1274, %v514, 0
      %v1279 = vsel %vm1274, %v515, 0
      %v1282 = vsel %vm1274, %v516, 0
      %v1285 = vsel %vm1274, %v517, 0
      %1287 = vmatpush.bf16.msra.mxu0 0
      %1288 = vmatpush.bf16.msra.mxu0 0
      %1289 = vmatpush.bf16.msra.mxu0 %v1099
      %1290 = vmatpush.bf16.msra.mxu0 %v1074
      %1291 = vmatpush.bf16.msra.mxu0 %v1049
      %1292 = vmatpush.bf16.msra.mxu0 %v1024
      %1293 = vmatpush.bf16.msra.mxu0 %v999
      %1294 = vmatpush.bf16.msra.mxu0 %v974
      %1295 = vmatmul.bf16.gmra.mxu0 %v1276
      %v1296 = vpop.f32.mrf.mxu0
      %v1297 = vadd.f32 0.0, %v1296
      %v1298 = vpop.f32.mrf.mxu0
      %v1299 = vadd.f32 0.0, %v1298
      %1300 = vmatmul.bf16.gmra.mxu0 %v1279
      %v1301 = vpop.f32.mrf.mxu0
      %v1302 = vadd.f32 0.0, %v1301
      %v1303 = vpop.f32.mrf.mxu0
      %v1304 = vadd.f32 0.0, %v1303
      %1305 = vmatmul.bf16.gmra.mxu0 %v1282
      %v1306 = vpop.f32.mrf.mxu0
      %v1307 = vadd.f32 0.0, %v1306
      %v1308 = vpop.f32.mrf.mxu0
      %v1309 = vadd.f32 0.0, %v1308
      %1310 = vmatmul.bf16.gmra.mxu0 %v1285
      %v1311 = vpop.f32.mrf.mxu0
      %v1312 = vadd.f32 0.0, %v1311
      %v1313 = vpop.f32.mrf.mxu0
      %v1314 = vadd.f32 0.0, %v1313
      %1315 = vdwg.mxu0
      %1316 = vmatpush.bf16.msra.mxu0 0
      %1317 = vmatpush.bf16.msra.mxu0 0
      %1318 = vmatpush.bf16.msra.mxu0 %v1100
      %1319 = vmatpush.bf16.msra.mxu0 %v1075
      %1320 = vmatpush.bf16.msra.mxu0 %v1050
      %1321 = vmatpush.bf16.msra.mxu0 %v1025
      %1322 = vmatpush.bf16.msra.mxu0 %v1000
      %1323 = vmatpush.bf16.msra.mxu0 %v975
      %1324 = vmatmul.bf16.gmra.mxu0 %v1276
      %v1325 = vpop.f32.mrf.mxu0
      %v1326 = vadd.f32 0.0, %v1325
      %v1327 = vpop.f32.mrf.mxu0
      %v1328 = vadd.f32 0.0, %v1327
      %1329 = vmatmul.bf16.gmra.mxu0 %v1279
      %v1330 = vpop.f32.mrf.mxu0
      %v1331 = vadd.f32 0.0, %v1330
      %v1332 = vpop.f32.mrf.mxu0
      %v1333 = vadd.f32 0.0, %v1332
      %1334 = vmatmul.bf16.gmra.mxu0 %v1282
      %v1335 = vpop.f32.mrf.mxu0
      %v1336 = vadd.f32 0.0, %v1335
      %v1337 = vpop.f32.mrf.mxu0
      %v1338 = vadd.f32 0.0, %v1337
      %1339 = vmatmul.bf16.gmra.mxu0 %v1285
      %v1340 = vpop.f32.mrf.mxu0
      %v1341 = vadd.f32 0.0, %v1340
      %v1342 = vpop.f32.mrf.mxu0
      %v1343 = vadd.f32 0.0, %v1342
      %1344 = vdwg.mxu0
      %1345 = vmatpush.bf16.msra.mxu0 0
      %1346 = vmatpush.bf16.msra.mxu0 0
      %1347 = vmatpush.bf16.msra.mxu0 %v1101
      %1348 = vmatpush.bf16.msra.mxu0 %v1076
      %1349 = vmatpush.bf16.msra.mxu0 %v1051
      %1350 = vmatpush.bf16.msra.mxu0 %v1026
      %1351 = vmatpush.bf16.msra.mxu0 %v1001
      %1352 = vmatpush.bf16.msra.mxu0 %v976
      %1353 = vmatmul.bf16.gmra.mxu0 %v1276
      %v1354 = vpop.f32.mrf.mxu0
      %v1355 = vadd.f32 0.0, %v1354
      %v1356 = vpop.f32.mrf.mxu0
      %v1357 = vadd.f32 0.0, %v1356
      %1358 = vmatmul.bf16.gmra.mxu0 %v1279
      %v1359 = vpop.f32.mrf.mxu0
      %v1360 = vadd.f32 0.0, %v1359
      %v1361 = vpop.f32.mrf.mxu0
      %v1362 = vadd.f32 0.0, %v1361
      %1363 = vmatmul.bf16.gmra.mxu0 %v1282
      %v1364 = vpop.f32.mrf.mxu0
      %v1365 = vadd.f32 0.0, %v1364
      %v1366 = vpop.f32.mrf.mxu0
      %v1367 = vadd.f32 0.0, %v1366
      %1368 = vmatmul.bf16.gmra.mxu0 %v1285
      %v1369 = vpop.f32.mrf.mxu0
      %v1370 = vadd.f32 0.0, %v1369
      %v1371 = vpop.f32.mrf.mxu0
      %v1372 = vadd.f32 0.0, %v1371
      %1373 = vdwg.mxu0
      %1374 = vmatpush.bf16.msra.mxu0 0
      %1375 = vmatpush.bf16.msra.mxu0 0
      %1376 = vmatpush.bf16.msra.mxu0 %v1102
      %1377 = vmatpush.bf16.msra.mxu0 %v1077
      %1378 = vmatpush.bf16.msra.mxu0 %v1052
      %1379 = vmatpush.bf16.msra.mxu0 %v1027
      %1380 = vmatpush.bf16.msra.mxu0 %v1002
      %1381 = vmatpush.bf16.msra.mxu0 %v977
      %1382 = vmatmul.bf16.gmra.mxu0 %v1276
      %v1383 = vpop.f32.mrf.mxu0
      %v1384 = vadd.f32 0.0, %v1383
      %v1385 = vpop.f32.mrf.mxu0
      %v1386 = vadd.f32 0.0, %v1385
      %1387 = vmatmul.bf16.gmra.mxu0 %v1279
      %v1388 = vpop.f32.mrf.mxu0
      %v1389 = vadd.f32 0.0, %v1388
      %v1390 = vpop.f32.mrf.mxu0
      %v1391 = vadd.f32 0.0, %v1390
      %1392 = vmatmul.bf16.gmra.mxu0 %v1282
      %v1393 = vpop.f32.mrf.mxu0
      %v1394 = vadd.f32 0.0, %v1393
      %v1395 = vpop.f32.mrf.mxu0
      %v1396 = vadd.f32 0.0, %v1395
      %1397 = vmatmul.bf16.gmra.mxu0 %v1285
      %v1398 = vpop.f32.mrf.mxu0
      %v1399 = vadd.f32 0.0, %v1398
      %v1400 = vpop.f32.mrf.mxu0
      %v1401 = vadd.f32 0.0, %v1400
      %1402 = vdwg.mxu0
      %1403 = vmatpush.bf16.msra.mxu0 0
      %1404 = vmatpush.bf16.msra.mxu0 0
      %1405 = vmatpush.bf16.msra.mxu0 %v1103
      %1406 = vmatpush.bf16.msra.mxu0 %v1078
      %1407 = vmatpush.bf16.msra.mxu0 %v1053
      %1408 = vmatpush.bf16.msra.mxu0 %v1028
      %1409 = vmatpush.bf16.msra.mxu0 %v1003
      %1410 = vmatpush.bf16.msra.mxu0 %v978
      %1411 = vmatmul.bf16.gmra.mxu0 %v1276
      %v1412 = vpop.f32.mrf.mxu0
      %v1413 = vadd.f32 0.0, %v1412
      %v1414 = vpop.f32.mrf.mxu0
      %v1415 = vadd.f32 0.0, %v1414
      %1416 = vmatmul.bf16.gmra.mxu0 %v1279
      %v1417 = vpop.f32.mrf.mxu0
      %v1418 = vadd.f32 0.0, %v1417
      %v1419 = vpop.f32.mrf.mxu0
      %v1420 = vadd.f32 0.0, %v1419
      %1421 = vmatmul.bf16.gmra.mxu0 %v1282
      %v1422 = vpop.f32.mrf.mxu0
      %v1423 = vadd.f32 0.0, %v1422
      %v1424 = vpop.f32.mrf.mxu0
      %v1425 = vadd.f32 0.0, %v1424
      %1426 = vmatmul.bf16.gmra.mxu0 %v1285
      %v1427 = vpop.f32.mrf.mxu0
      %v1428 = vadd.f32 0.0, %v1427
      %v1429 = vpop.f32.mrf.mxu0
      %v1430 = vadd.f32 0.0, %v1429
      %1431 = vdwg.mxu0
      %1432 = vmatpush.bf16.msra.mxu0 0
      %1433 = vmatpush.bf16.msra.mxu0 0
      %1434 = vmatpush.bf16.msra.mxu0 %v1104
      %1435 = vmatpush.bf16.msra.mxu0 %v1079
      %1436 = vmatpush.bf16.msra.mxu0 %v1054
      %1437 = vmatpush.bf16.msra.mxu0 %v1029
      %1438 = vmatpush.bf16.msra.mxu0 %v1004
      %1439 = vmatpush.bf16.msra.mxu0 %v979
      %1440 = vmatmul.bf16.gmra.mxu0 %v1276
      %v1441 = vpop.f32.mrf.mxu0
      %v1442 = vadd.f32 0.0, %v1441
      %v1443 = vpop.f32.mrf.mxu0
      %v1444 = vadd.f32 0.0, %v1443
      %1445 = vmatmul.bf16.gmra.mxu0 %v1279
      %v1446 = vpop.f32.mrf.mxu0
      %v1447 = vadd.f32 0.0, %v1446
      %v1448 = vpop.f32.mrf.mxu0
      %v1449 = vadd.f32 0.0, %v1448
      %1450 = vmatmul.bf16.gmra.mxu0 %v1282
      %v1451 = vpop.f32.mrf.mxu0
      %v1452 = vadd.f32 0.0, %v1451
      %v1453 = vpop.f32.mrf.mxu0
      %v1454 = vadd.f32 0.0, %v1453
      %1455 = vmatmul.bf16.gmra.mxu0 %v1285
      %v1456 = vpop.f32.mrf.mxu0
      %v1457 = vadd.f32 0.0, %v1456
      %v1458 = vpop.f32.mrf.mxu0
      %v1459 = vadd.f32 0.0, %v1458
      %1460 = vdwg.mxu0
      %1461 = vmatpush.bf16.msra.mxu0 0
      %1462 = vmatpush.bf16.msra.mxu0 0
      %1463 = vmatpush.bf16.msra.mxu0 %v1105
      %1464 = vmatpush.bf16.msra.mxu0 %v1080
      %1465 = vmatpush.bf16.msra.mxu0 %v1055
      %1466 = vmatpush.bf16.msra.mxu0 %v1030
      %1467 = vmatpush.bf16.msra.mxu0 %v1005
      %1468 = vmatpush.bf16.msra.mxu0 %v980
      %1469 = vmatmul.bf16.gmra.mxu0 %v1276
      %v1470 = vpop.f32.mrf.mxu0
      %v1471 = vadd.f32 0.0, %v1470
      %v1472 = vpop.f32.mrf.mxu0
      %v1473 = vadd.f32 0.0, %v1472
      %1474 = vmatmul.bf16.gmra.mxu0 %v1279
      %v1475 = vpop.f32.mrf.mxu0
      %v1476 = vadd.f32 0.0, %v1475
      %v1477 = vpop.f32.mrf.mxu0
      %v1478 = vadd.f32 0.0, %v1477
      %1479 = vmatmul.bf16.gmra.mxu0 %v1282
      %v1480 = vpop.f32.mrf.mxu0
      %v1481 = vadd.f32 0.0, %v1480
      %v1482 = vpop.f32.mrf.mxu0
      %v1483 = vadd.f32 0.0, %v1482
      %1484 = vmatmul.bf16.gmra.mxu0 %v1285
      %v1485 = vpop.f32.mrf.mxu0
      %v1486 = vadd.f32 0.0, %v1485
      %v1487 = vpop.f32.mrf.mxu0
      %v1488 = vadd.f32 0.0, %v1487
      %1489 = vdwg.mxu0
      %1490 = vmatpush.bf16.msra.mxu0 0
      %1491 = vmatpush.bf16.msra.mxu0 0
      %1492 = vmatpush.bf16.msra.mxu0 %v1106
      %1493 = vmatpush.bf16.msra.mxu0 %v1081
      %1494 = vmatpush.bf16.msra.mxu0 %v1056
      %1495 = vmatpush.bf16.msra.mxu0 %v1031
      %1496 = vmatpush.bf16.msra.mxu0 %v1006
      %1497 = vmatpush.bf16.msra.mxu0 %v981
      %1498 = vmatmul.bf16.gmra.mxu0 %v1276
      %v1499 = vpop.f32.mrf.mxu0
      %v1500 = vadd.f32 0.0, %v1499
      %v1501 = vpop.f32.mrf.mxu0
      %v1502 = vadd.f32 0.0, %v1501
      %1503 = vmatmul.bf16.gmra.mxu0 %v1279
      %v1504 = vpop.f32.mrf.mxu0
      %v1505 = vadd.f32 0.0, %v1504
      %v1506 = vpop.f32.mrf.mxu0
      %v1507 = vadd.f32 0.0, %v1506
      %1508 = vmatmul.bf16.gmra.mxu0 %v1282
      %v1509 = vpop.f32.mrf.mxu0
      %v1510 = vadd.f32 0.0, %v1509
      %v1511 = vpop.f32.mrf.mxu0
      %v1512 = vadd.f32 0.0, %v1511
      %1513 = vmatmul.bf16.gmra.mxu0 %v1285
      %v1514 = vpop.f32.mrf.mxu0
      %v1515 = vadd.f32 0.0, %v1514
      %v1516 = vpop.f32.mrf.mxu0
      %v1517 = vadd.f32 0.0, %v1516
      %1518 = vdwg.mxu0
      %1519 = vmatpush.bf16.msra.mxu0 0
      %1520 = vmatpush.bf16.msra.mxu0 0
      %1521 = vmatpush.bf16.msra.mxu0 %v1107
      %1522 = vmatpush.bf16.msra.mxu0 %v1082
      %1523 = vmatpush.bf16.msra.mxu0 %v1057
      %1524 = vmatpush.bf16.msra.mxu0 %v1032
      %1525 = vmatpush.bf16.msra.mxu0 %v1007
      %1526 = vmatpush.bf16.msra.mxu0 %v982
      %1527 = vmatmul.bf16.gmra.mxu0 %v1276
      %v1528 = vpop.f32.mrf.mxu0
      %v1529 = vadd.f32 0.0, %v1528
      %v1530 = vpop.f32.mrf.mxu0
      %v1531 = vadd.f32 0.0, %v1530
      %1532 = vmatmul.bf16.gmra.mxu0 %v1279
      %v1533 = vpop.f32.mrf.mxu0
      %v1534 = vadd.f32 0.0, %v1533
      %v1535 = vpop.f32.mrf.mxu0
      %v1536 = vadd.f32 0.0, %v1535
      %1537 = vmatmul.bf16.gmra.mxu0 %v1282
      %v1538 = vpop.f32.mrf.mxu0
      %v1539 = vadd.f32 0.0, %v1538
      %v1540 = vpop.f32.mrf.mxu0
      %v1541 = vadd.f32 0.0, %v1540
      %1542 = vmatmul.bf16.gmra.mxu0 %v1285
      %v1543 = vpop.f32.mrf.mxu0
      %v1544 = vadd.f32 0.0, %v1543
      %v1545 = vpop.f32.mrf.mxu0
      %v1546 = vadd.f32 0.0, %v1545
      %1547 = vdwg.mxu0
      %1548 = vmatpush.bf16.msra.mxu0 0
      %1549 = vmatpush.bf16.msra.mxu0 0
      %1550 = vmatpush.bf16.msra.mxu0 %v1108
      %1551 = vmatpush.bf16.msra.mxu0 %v1083
      %1552 = vmatpush.bf16.msra.mxu0 %v1058
      %1553 = vmatpush.bf16.msra.mxu0 %v1033
      %1554 = vmatpush.bf16.msra.mxu0 %v1008
      %1555 = vmatpush.bf16.msra.mxu0 %v983
      %1556 = vmatmul.bf16.gmra.mxu0 %v1276
      %v1557 = vpop.f32.mrf.mxu0
      %v1558 = vadd.f32 0.0, %v1557
      %v1559 = vpop.f32.mrf.mxu0
      %v1560 = vadd.f32 0.0, %v1559
      %1561 = vmatmul.bf16.gmra.mxu0 %v1279
      %v1562 = vpop.f32.mrf.mxu0
      %v1563 = vadd.f32 0.0, %v1562
      %v1564 = vpop.f32.mrf.mxu0
      %v1565 = vadd.f32 0.0, %v1564
      %1566 = vmatmul.bf16.gmra.mxu0 %v1282
      %v1567 = vpop.f32.mrf.mxu0
      %v1568 = vadd.f32 0.0, %v1567
      %v1569 = vpop.f32.mrf.mxu0
      %v1570 = vadd.f32 0.0, %v1569
      %1571 = vmatmul.bf16.gmra.mxu0 %v1285
      %v1572 = vpop.f32.mrf.mxu0
      %v1573 = vadd.f32 0.0, %v1572
      %v1574 = vpop.f32.mrf.mxu0
      %v1575 = vadd.f32 0.0, %v1574
      %1576 = vdwg.mxu0
      %1577 = vmatpush.bf16.msra.mxu0 0
      %1578 = vmatpush.bf16.msra.mxu0 0
      %1579 = vmatpush.bf16.msra.mxu0 %v1109
      %1580 = vmatpush.bf16.msra.mxu0 %v1084
      %1581 = vmatpush.bf16.msra.mxu0 %v1059
      %1582 = vmatpush.bf16.msra.mxu0 %v1034
      %1583 = vmatpush.bf16.msra.mxu0 %v1009
      %1584 = vmatpush.bf16.msra.mxu0 %v984
      %1585 = vmatmul.bf16.gmra.mxu0 %v1276
      %v1586 = vpop.f32.mrf.mxu0
      %v1587 = vadd.f32 0.0, %v1586
      %v1588 = vpop.f32.mrf.mxu0
      %v1589 = vadd.f32 0.0, %v1588
      %1590 = vmatmul.bf16.gmra.mxu0 %v1279
      %v1591 = vpop.f32.mrf.mxu0
      %v1592 = vadd.f32 0.0, %v1591
      %v1593 = vpop.f32.mrf.mxu0
      %v1594 = vadd.f32 0.0, %v1593
      %1595 = vmatmul.bf16.gmra.mxu0 %v1282
      %v1596 = vpop.f32.mrf.mxu0
      %v1597 = vadd.f32 0.0, %v1596
      %v1598 = vpop.f32.mrf.mxu0
      %v1599 = vadd.f32 0.0, %v1598
      %1600 = vmatmul.bf16.gmra.mxu0 %v1285
      %v1601 = vpop.f32.mrf.mxu0
      %v1602 = vadd.f32 0.0, %v1601
      %v1603 = vpop.f32.mrf.mxu0
      %v1604 = vadd.f32 0.0, %v1603
      %1605 = vdwg.mxu0
      %1606 = vmatpush.bf16.msra.mxu0 0
      %1607 = vmatpush.bf16.msra.mxu0 0
      %1608 = vmatpush.bf16.msra.mxu0 %v1110
      %1609 = vmatpush.bf16.msra.mxu0 %v1085
      %1610 = vmatpush.bf16.msra.mxu0 %v1060
      %1611 = vmatpush.bf16.msra.mxu0 %v1035
      %1612 = vmatpush.bf16.msra.mxu0 %v1010
      %1613 = vmatpush.bf16.msra.mxu0 %v985
      %1614 = vmatmul.bf16.gmra.mxu0 %v1276
      %v1615 = vpop.f32.mrf.mxu0
      %v1616 = vadd.f32 0.0, %v1615
      %v1617 = vpop.f32.mrf.mxu0
      %v1618 = vadd.f32 0.0, %v1617
      %1619 = vmatmul.bf16.gmra.mxu0 %v1279
      %v1620 = vpop.f32.mrf.mxu0
      %v1621 = vadd.f32 0.0, %v1620
      %v1622 = vpop.f32.mrf.mxu0
      %v1623 = vadd.f32 0.0, %v1622
      %1624 = vmatmul.bf16.gmra.mxu0 %v1282
      %v1625 = vpop.f32.mrf.mxu0
      %v1626 = vadd.f32 0.0, %v1625
      %v1627 = vpop.f32.mrf.mxu0
      %v1628 = vadd.f32 0.0, %v1627
      %1629 = vmatmul.bf16.gmra.mxu0 %v1285
      %v1630 = vpop.f32.mrf.mxu0
      %v1631 = vadd.f32 0.0, %v1630
      %v1632 = vpop.f32.mrf.mxu0
      %v1633 = vadd.f32 0.0, %v1632
      %1634 = vdwg.mxu0
      %1635 = vmatpush.bf16.msra.mxu0 0
      %1636 = vmatpush.bf16.msra.mxu0 0
      %1637 = vmatpush.bf16.msra.mxu0 %v1111
      %1638 = vmatpush.bf16.msra.mxu0 %v1086
      %1639 = vmatpush.bf16.msra.mxu0 %v1061
      %1640 = vmatpush.bf16.msra.mxu0 %v1036
      %1641 = vmatpush.bf16.msra.mxu0 %v1011
      %1642 = vmatpush.bf16.msra.mxu0 %v986
      %1643 = vmatmul.bf16.gmra.mxu0 %v1276
      %v1644 = vpop.f32.mrf.mxu0
      %v1645 = vadd.f32 0.0, %v1644
      %v1646 = vpop.f32.mrf.mxu0
      %v1647 = vadd.f32 0.0, %v1646
      %1648 = vmatmul.bf16.gmra.mxu0 %v1279
      %v1649 = vpop.f32.mrf.mxu0
      %v1650 = vadd.f32 0.0, %v1649
      %v1651 = vpop.f32.mrf.mxu0
      %v1652 = vadd.f32 0.0, %v1651
      %1653 = vmatmul.bf16.gmra.mxu0 %v1282
      %v1654 = vpop.f32.mrf.mxu0
      %v1655 = vadd.f32 0.0, %v1654
      %v1656 = vpop.f32.mrf.mxu0
      %v1657 = vadd.f32 0.0, %v1656
      %1658 = vmatmul.bf16.gmra.mxu0 %v1285
      %v1659 = vpop.f32.mrf.mxu0
      %v1660 = vadd.f32 0.0, %v1659
      %v1661 = vpop.f32.mrf.mxu0
      %v1662 = vadd.f32 0.0, %v1661
      %1663 = vdwg.mxu0
      %1664 = vmatpush.bf16.msra.mxu0 0
      %1665 = vmatpush.bf16.msra.mxu0 0
      %1666 = vmatpush.bf16.msra.mxu0 %v1112
      %1667 = vmatpush.bf16.msra.mxu0 %v1087
      %1668 = vmatpush.bf16.msra.mxu0 %v1062
      %1669 = vmatpush.bf16.msra.mxu0 %v1037
      %1670 = vmatpush.bf16.msra.mxu0 %v1012
      %1671 = vmatpush.bf16.msra.mxu0 %v987
      %1672 = vmatmul.bf16.gmra.mxu0 %v1276
      %v1673 = vpop.f32.mrf.mxu0
      %v1674 = vadd.f32 0.0, %v1673
      %v1675 = vpop.f32.mrf.mxu0
      %v1676 = vadd.f32 0.0, %v1675
      %1677 = vmatmul.bf16.gmra.mxu0 %v1279
      %v1678 = vpop.f32.mrf.mxu0
      %v1679 = vadd.f32 0.0, %v1678
      %v1680 = vpop.f32.mrf.mxu0
      %v1681 = vadd.f32 0.0, %v1680
      %1682 = vmatmul.bf16.gmra.mxu0 %v1282
      %v1683 = vpop.f32.mrf.mxu0
      %v1684 = vadd.f32 0.0, %v1683
      %v1685 = vpop.f32.mrf.mxu0
      %v1686 = vadd.f32 0.0, %v1685
      %1687 = vmatmul.bf16.gmra.mxu0 %v1285
      %v1688 = vpop.f32.mrf.mxu0
      %v1689 = vadd.f32 0.0, %v1688
      %v1690 = vpop.f32.mrf.mxu0
      %v1691 = vadd.f32 0.0, %v1690
      %1692 = vdwg.mxu0
      %1693 = vmatpush.bf16.msra.mxu0 0
      %1694 = vmatpush.bf16.msra.mxu0 0
      %1695 = vmatpush.bf16.msra.mxu0 %v1113
      %1696 = vmatpush.bf16.msra.mxu0 %v1088
      %1697 = vmatpush.bf16.msra.mxu0 %v1063
      %1698 = vmatpush.bf16.msra.mxu0 %v1038
      %1699 = vmatpush.bf16.msra.mxu0 %v1013
      %1700 = vmatpush.bf16.msra.mxu0 %v988
      %1701 = vmatmul.bf16.gmra.mxu0 %v1276
      %v1702 = vpop.f32.mrf.mxu0
      %v1703 = vadd.f32 0.0, %v1702
      %v1704 = vpop.f32.mrf.mxu0
      %v1705 = vadd.f32 0.0, %v1704
      %1706 = vmatmul.bf16.gmra.mxu0 %v1279
      %v1707 = vpop.f32.mrf.mxu0
      %v1708 = vadd.f32 0.0, %v1707
      %v1709 = vpop.f32.mrf.mxu0
      %v1710 = vadd.f32 0.0, %v1709
      %1711 = vmatmul.bf16.gmra.mxu0 %v1282
      %v1712 = vpop.f32.mrf.mxu0
      %v1713 = vadd.f32 0.0, %v1712
      %v1714 = vpop.f32.mrf.mxu0
      %v1715 = vadd.f32 0.0, %v1714
      %1716 = vmatmul.bf16.gmra.mxu0 %v1285
      %v1717 = vpop.f32.mrf.mxu0
      %v1718 = vadd.f32 0.0, %v1717
      %v1719 = vpop.f32.mrf.mxu0
      %v1720 = vadd.f32 0.0, %v1719
      %1721 = vdwg.mxu0
      %1722 = vmatpush.bf16.msra.mxu0 0
      %1723 = vmatpush.bf16.msra.mxu0 0
      %1724 = vmatpush.bf16.msra.mxu0 %v1114
      %1725 = vmatpush.bf16.msra.mxu0 %v1089
      %1726 = vmatpush.bf16.msra.mxu0 %v1064
      %1727 = vmatpush.bf16.msra.mxu0 %v1039
      %1728 = vmatpush.bf16.msra.mxu0 %v1014
      %1729 = vmatpush.bf16.msra.mxu0 %v989
      %1730 = vmatmul.bf16.gmra.mxu0 %v1276
      %v1731 = vpop.f32.mrf.mxu0
      %v1732 = vadd.f32 0.0, %v1731
      %v1733 = vpop.f32.mrf.mxu0
      %v1734 = vadd.f32 0.0, %v1733
      %1735 = vmatmul.bf16.gmra.mxu0 %v1279
      %v1736 = vpop.f32.mrf.mxu0
      %v1737 = vadd.f32 0.0, %v1736
      %v1738 = vpop.f32.mrf.mxu0
      %v1739 = vadd.f32 0.0, %v1738
      %1740 = vmatmul.bf16.gmra.mxu0 %v1282
      %v1741 = vpop.f32.mrf.mxu0
      %v1742 = vadd.f32 0.0, %v1741
      %v1743 = vpop.f32.mrf.mxu0
      %v1744 = vadd.f32 0.0, %v1743
      %1745 = vmatmul.bf16.gmra.mxu0 %v1285
      %v1746 = vpop.f32.mrf.mxu0
      %v1747 = vadd.f32 0.0, %v1746
      %v1748 = vpop.f32.mrf.mxu0
      %v1749 = vadd.f32 0.0, %v1748
      %1750 = vdwg.mxu0
      %1751 = vmatpush.bf16.msra.mxu0 0
      %1752 = vmatpush.bf16.msra.mxu0 0
      %1753 = vmatpush.bf16.msra.mxu0 %v1115
      %1754 = vmatpush.bf16.msra.mxu0 %v1090
      %1755 = vmatpush.bf16.msra.mxu0 %v1065
      %1756 = vmatpush.bf16.msra.mxu0 %v1040
      %1757 = vmatpush.bf16.msra.mxu0 %v1015
      %1758 = vmatpush.bf16.msra.mxu0 %v990
      %1759 = vmatmul.bf16.gmra.mxu0 %v1276
      %v1760 = vpop.f32.mrf.mxu0
      %v1761 = vadd.f32 0.0, %v1760
      %v1762 = vpop.f32.mrf.mxu0
      %v1763 = vadd.f32 0.0, %v1762
      %1764 = vmatmul.bf16.gmra.mxu0 %v1279
      %v1765 = vpop.f32.mrf.mxu0
      %v1766 = vadd.f32 0.0, %v1765
      %v1767 = vpop.f32.mrf.mxu0
      %v1768 = vadd.f32 0.0, %v1767
      %1769 = vmatmul.bf16.gmra.mxu0 %v1282
      %v1770 = vpop.f32.mrf.mxu0
      %v1771 = vadd.f32 0.0, %v1770
      %v1772 = vpop.f32.mrf.mxu0
      %v1773 = vadd.f32 0.0, %v1772
      %1774 = vmatmul.bf16.gmra.mxu0 %v1285
      %v1775 = vpop.f32.mrf.mxu0
      %v1776 = vadd.f32 0.0, %v1775
      %v1777 = vpop.f32.mrf.mxu0
      %v1778 = vadd.f32 0.0, %v1777
      %1779 = vdwg.mxu0
      %1780 = vmatpush.bf16.msra.mxu0 0
      %1781 = vmatpush.bf16.msra.mxu0 0
      %1782 = vmatpush.bf16.msra.mxu0 %v1116
      %1783 = vmatpush.bf16.msra.mxu0 %v1091
      %1784 = vmatpush.bf16.msra.mxu0 %v1066
      %1785 = vmatpush.bf16.msra.mxu0 %v1041
      %1786 = vmatpush.bf16.msra.mxu0 %v1016
      %1787 = vmatpush.bf16.msra.mxu0 %v991
      %1788 = vmatmul.bf16.gmra.mxu0 %v1276
      %v1789 = vpop.f32.mrf.mxu0
      %v1790 = vadd.f32 0.0, %v1789
      %v1791 = vpop.f32.mrf.mxu0
      %v1792 = vadd.f32 0.0, %v1791
      %1793 = vmatmul.bf16.gmra.mxu0 %v1279
      %v1794 = vpop.f32.mrf.mxu0
      %v1795 = vadd.f32 0.0, %v1794
      %v1796 = vpop.f32.mrf.mxu0
      %v1797 = vadd.f32 0.0, %v1796
      %1798 = vmatmul.bf16.gmra.mxu0 %v1282
      %v1799 = vpop.f32.mrf.mxu0
      %v1800 = vadd.f32 0.0, %v1799
      %v1801 = vpop.f32.mrf.mxu0
      %v1802 = vadd.f32 0.0, %v1801
      %1803 = vmatmul.bf16.gmra.mxu0 %v1285
      %v1804 = vpop.f32.mrf.mxu0
      %v1805 = vadd.f32 0.0, %v1804
      %v1806 = vpop.f32.mrf.mxu0
      %v1807 = vadd.f32 0.0, %v1806
      %1808 = vdwg.mxu0
      %1809 = vmatpush.bf16.msra.mxu0 0
      %1810 = vmatpush.bf16.msra.mxu0 0
      %1811 = vmatpush.bf16.msra.mxu0 %v1117
      %1812 = vmatpush.bf16.msra.mxu0 %v1092
      %1813 = vmatpush.bf16.msra.mxu0 %v1067
      %1814 = vmatpush.bf16.msra.mxu0 %v1042
      %1815 = vmatpush.bf16.msra.mxu0 %v1017
      %1816 = vmatpush.bf16.msra.mxu0 %v992
      %1817 = vmatmul.bf16.gmra.mxu0 %v1276
      %v1818 = vpop.f32.mrf.mxu0
      %v1819 = vadd.f32 0.0, %v1818
      %v1820 = vpop.f32.mrf.mxu0
      %v1821 = vadd.f32 0.0, %v1820
      %1822 = vmatmul.bf16.gmra.mxu0 %v1279
      %v1823 = vpop.f32.mrf.mxu0
      %v1824 = vadd.f32 0.0, %v1823
      %v1825 = vpop.f32.mrf.mxu0
      %v1826 = vadd.f32 0.0, %v1825
      %1827 = vmatmul.bf16.gmra.mxu0 %v1282
      %v1828 = vpop.f32.mrf.mxu0
      %v1829 = vadd.f32 0.0, %v1828
      %v1830 = vpop.f32.mrf.mxu0
      %v1831 = vadd.f32 0.0, %v1830
      %1832 = vmatmul.bf16.gmra.mxu0 %v1285
      %v1833 = vpop.f32.mrf.mxu0
      %v1834 = vadd.f32 0.0, %v1833
      %v1835 = vpop.f32.mrf.mxu0
      %v1836 = vadd.f32 0.0, %v1835
      %1837 = vdwg.mxu0
      %1838 = vmatpush.bf16.msra.mxu0 0
      %1839 = vmatpush.bf16.msra.mxu0 0
      %1840 = vmatpush.bf16.msra.mxu0 %v1118
      %1841 = vmatpush.bf16.msra.mxu0 %v1093
      %1842 = vmatpush.bf16.msra.mxu0 %v1068
      %1843 = vmatpush.bf16.msra.mxu0 %v1043
      %1844 = vmatpush.bf16.msra.mxu0 %v1018
      %1845 = vmatpush.bf16.msra.mxu0 %v993
      %1846 = vmatmul.bf16.gmra.mxu0 %v1276
      %v1847 = vpop.f32.mrf.mxu0
      %v1848 = vadd.f32 0.0, %v1847
      %v1849 = vpop.f32.mrf.mxu0
      %v1850 = vadd.f32 0.0, %v1849
      %1851 = vmatmul.bf16.gmra.mxu0 %v1279
      %v1852 = vpop.f32.mrf.mxu0
      %v1853 = vadd.f32 0.0, %v1852
      %v1854 = vpop.f32.mrf.mxu0
      %v1855 = vadd.f32 0.0, %v1854
      %1856 = vmatmul.bf16.gmra.mxu0 %v1282
      %v1857 = vpop.f32.mrf.mxu0
      %v1858 = vadd.f32 0.0, %v1857
      %v1859 = vpop.f32.mrf.mxu0
      %v1860 = vadd.f32 0.0, %v1859
      %1861 = vmatmul.bf16.gmra.mxu0 %v1285
      %v1862 = vpop.f32.mrf.mxu0
      %v1863 = vadd.f32 0.0, %v1862
      %v1864 = vpop.f32.mrf.mxu0
      %v1865 = vadd.f32 0.0, %v1864
      %1866 = vdwg.mxu0
      %1867 = vmatpush.bf16.msra.mxu0 0
      %1868 = vmatpush.bf16.msra.mxu0 0
      %1869 = vmatpush.bf16.msra.mxu0 %v1119
      %1870 = vmatpush.bf16.msra.mxu0 %v1094
      %1871 = vmatpush.bf16.msra.mxu0 %v1069
      %1872 = vmatpush.bf16.msra.mxu0 %v1044
      %1873 = vmatpush.bf16.msra.mxu0 %v1019
      %1874 = vmatpush.bf16.msra.mxu0 %v994
      %1875 = vmatmul.bf16.gmra.mxu0 %v1276
      %v1876 = vpop.f32.mrf.mxu0
      %v1877 = vadd.f32 0.0, %v1876
      %v1878 = vpop.f32.mrf.mxu0
      %v1879 = vadd.f32 0.0, %v1878
      %1880 = vmatmul.bf16.gmra.mxu0 %v1279
      %v1881 = vpop.f32.mrf.mxu0
      %v1882 = vadd.f32 0.0, %v1881
      %v1883 = vpop.f32.mrf.mxu0
      %v1884 = vadd.f32 0.0, %v1883
      %1885 = vmatmul.bf16.gmra.mxu0 %v1282
      %v1886 = vpop.f32.mrf.mxu0
      %v1887 = vadd.f32 0.0, %v1886
      %v1888 = vpop.f32.mrf.mxu0
      %v1889 = vadd.f32 0.0, %v1888
      %1890 = vmatmul.bf16.gmra.mxu0 %v1285
      %v1891 = vpop.f32.mrf.mxu0
      %v1892 = vadd.f32 0.0, %v1891
      %v1893 = vpop.f32.mrf.mxu0
      %v1894 = vadd.f32 0.0, %v1893
      %1895 = vdwg.mxu0
      %1896 = vmatpush.bf16.msra.mxu0 0
      %1897 = vmatpush.bf16.msra.mxu0 0
      %1898 = vmatpush.bf16.msra.mxu0 %v1120
      %1899 = vmatpush.bf16.msra.mxu0 %v1095
      %1900 = vmatpush.bf16.msra.mxu0 %v1070
      %1901 = vmatpush.bf16.msra.mxu0 %v1045
      %1902 = vmatpush.bf16.msra.mxu0 %v1020
      %1903 = vmatpush.bf16.msra.mxu0 %v995
      %1904 = vmatmul.bf16.gmra.mxu0 %v1276
      %v1905 = vpop.f32.mrf.mxu0
      %v1906 = vadd.f32 0.0, %v1905
      %v1907 = vpop.f32.mrf.mxu0
      %v1908 = vadd.f32 0.0, %v1907
      %1909 = vmatmul.bf16.gmra.mxu0 %v1279
      %v1910 = vpop.f32.mrf.mxu0
      %v1911 = vadd.f32 0.0, %v1910
      %v1912 = vpop.f32.mrf.mxu0
      %v1913 = vadd.f32 0.0, %v1912
      %1914 = vmatmul.bf16.gmra.mxu0 %v1282
      %v1915 = vpop.f32.mrf.mxu0
      %v1916 = vadd.f32 0.0, %v1915
      %v1917 = vpop.f32.mrf.mxu0
      %v1918 = vadd.f32 0.0, %v1917
      %1919 = vmatmul.bf16.gmra.mxu0 %v1285
      %v1920 = vpop.f32.mrf.mxu0
      %v1921 = vadd.f32 0.0, %v1920
      %v1922 = vpop.f32.mrf.mxu0
      %v1923 = vadd.f32 0.0, %v1922
      %1924 = vdwg.mxu0
      %1925 = vmatpush.bf16.msra.mxu0 0
      %1926 = vmatpush.bf16.msra.mxu0 0
      %1927 = vmatpush.bf16.msra.mxu0 %v1121
      %1928 = vmatpush.bf16.msra.mxu0 %v1096
      %1929 = vmatpush.bf16.msra.mxu0 %v1071
      %1930 = vmatpush.bf16.msra.mxu0 %v1046
      %1931 = vmatpush.bf16.msra.mxu0 %v1021
      %1932 = vmatpush.bf16.msra.mxu0 %v996
      %1933 = vmatmul.bf16.gmra.mxu0 %v1276
      %v1934 = vpop.f32.mrf.mxu0
      %v1935 = vadd.f32 0.0, %v1934
      %v1936 = vpop.f32.mrf.mxu0
      %v1937 = vadd.f32 0.0, %v1936
      %1938 = vmatmul.bf16.gmra.mxu0 %v1279
      %v1939 = vpop.f32.mrf.mxu0
      %v1940 = vadd.f32 0.0, %v1939
      %v1941 = vpop.f32.mrf.mxu0
      %v1942 = vadd.f32 0.0, %v1941
      %1943 = vmatmul.bf16.gmra.mxu0 %v1282
      %v1944 = vpop.f32.mrf.mxu0
      %v1945 = vadd.f32 0.0, %v1944
      %v1946 = vpop.f32.mrf.mxu0
      %v1947 = vadd.f32 0.0, %v1946
      %1948 = vmatmul.bf16.gmra.mxu0 %v1285
      %v1949 = vpop.f32.mrf.mxu0
      %v1950 = vadd.f32 0.0, %v1949
      %v1951 = vpop.f32.mrf.mxu0
      %v1952 = vadd.f32 0.0, %v1951
      %1953 = vdwg.mxu0
      %1954 = vmatpush.bf16.msra.mxu0 0
      %1955 = vmatpush.bf16.msra.mxu0 0
      %1956 = vmatpush.bf16.msra.mxu0 %v1122
      %1957 = vmatpush.bf16.msra.mxu0 %v1097
      %1958 = vmatpush.bf16.msra.mxu0 %v1072
      %1959 = vmatpush.bf16.msra.mxu0 %v1047
      %1960 = vmatpush.bf16.msra.mxu0 %v1022
      %1961 = vmatpush.bf16.msra.mxu0 %v997
      %1962 = vmatmul.bf16.gmra.mxu0 %v1276
      %v1963 = vpop.f32.mrf.mxu0
      %v1964 = vadd.f32 0.0, %v1963
      %v1965 = vpop.f32.mrf.mxu0
      %v1966 = vadd.f32 0.0, %v1965
      %1967 = vmatmul.bf16.gmra.mxu0 %v1279
      %v1968 = vpop.f32.mrf.mxu0
      %v1969 = vadd.f32 0.0, %v1968
      %v1970 = vpop.f32.mrf.mxu0
      %v1971 = vadd.f32 0.0, %v1970
      %1972 = vmatmul.bf16.gmra.mxu0 %v1282
      %v1973 = vpop.f32.mrf.mxu0
      %v1974 = vadd.f32 0.0, %v1973
      %v1975 = vpop.f32.mrf.mxu0
      %v1976 = vadd.f32 0.0, %v1975
      %1977 = vmatmul.bf16.gmra.mxu0 %v1285
      %v1978 = vpop.f32.mrf.mxu0
      %v1979 = vadd.f32 0.0, %v1978
      %v1980 = vpop.f32.mrf.mxu0
      %v1981 = vadd.f32 0.0, %v1980
      %1982 = vdwg.mxu0
      %1983 = vmatpush.bf16.msra.mxu0 0
      %1984 = vmatpush.bf16.msra.mxu0 0
      %1985 = vmatpush.bf16.msra.mxu0 %v1123
      %1986 = vmatpush.bf16.msra.mxu0 %v1098
      %1987 = vmatpush.bf16.msra.mxu0 %v1073
      %1988 = vmatpush.bf16.msra.mxu0 %v1048
      %1989 = vmatpush.bf16.msra.mxu0 %v1023
      %1990 = vmatpush.bf16.msra.mxu0 %v998
      %1991 = vmatmul.bf16.gmra.mxu0 %v1276
      %v1992 = vpop.f32.mrf.mxu0
      %v1993 = vadd.f32 0.0, %v1992
      %v1994 = vpop.f32.mrf.mxu0
      %v1995 = vadd.f32 0.0, %v1994
      %1996 = vmatmul.bf16.gmra.mxu0 %v1279
      %v1997 = vpop.f32.mrf.mxu0
      %v1998 = vadd.f32 0.0, %v1997
      %v1999 = vpop.f32.mrf.mxu0
      %v2000 = vadd.f32 0.0, %v1999
      %2001 = vmatmul.bf16.gmra.mxu0 %v1282
      %v2002 = vpop.f32.mrf.mxu0
      %v2003 = vadd.f32 0.0, %v2002
      %v2004 = vpop.f32.mrf.mxu0
      %v2005 = vadd.f32 0.0, %v2004
      %2006 = vmatmul.bf16.gmra.mxu0 %v1285
      %v2007 = vpop.f32.mrf.mxu0
      %v2008 = vadd.f32 0.0, %v2007
      %v2009 = vpop.f32.mrf.mxu0
      %v2010 = vadd.f32 0.0, %v2009
      %2011 = vdwg.mxu0
      %v2012 = vand.u32 2147483647, %v1297
      %v2013 = vand.u32 2147483647, %v1326
      %v2014 = vand.u32 2147483647, %v1355
      %v2015 = vand.u32 2147483647, %v1384
      %v2016 = vand.u32 2147483647, %v1413
      %v2017 = vand.u32 2147483647, %v1442
      %v2018 = vand.u32 2147483647, %v1471
      %v2019 = vand.u32 2147483647, %v1500
      %v2020 = vand.u32 2147483647, %v1529
      %v2021 = vand.u32 2147483647, %v1558
      %v2022 = vand.u32 2147483647, %v1587
      %v2023 = vand.u32 2147483647, %v1616
      %v2024 = vand.u32 2147483647, %v1645
      %v2025 = vand.u32 2147483647, %v1674
      %v2026 = vand.u32 2147483647, %v1703
      %v2027 = vand.u32 2147483647, %v1732
      %v2028 = vand.u32 2147483647, %v1761
      %v2029 = vand.u32 2147483647, %v1790
      %v2030 = vand.u32 2147483647, %v1819
      %v2031 = vand.u32 2147483647, %v1848
      %v2032 = vand.u32 2147483647, %v1877
      %v2033 = vand.u32 2147483647, %v1906
      %v2034 = vand.u32 2147483647, %v1935
      %v2035 = vand.u32 2147483647, %v1964
      %v2036 = vand.u32 2147483647, %v1993
      %v2037 = vand.u32 2147483647, %v1299
      %v2038 = vand.u32 2147483647, %v1328
      %v2039 = vand.u32 2147483647, %v1357
      %v2040 = vand.u32 2147483647, %v1386
      %v2041 = vand.u32 2147483647, %v1415
      %v2042 = vand.u32 2147483647, %v1444
      %v2043 = vand.u32 2147483647, %v1473
      %v2044 = vand.u32 2147483647, %v1502
      %v2045 = vand.u32 2147483647, %v1531
      %v2046 = vand.u32 2147483647, %v1560
      %v2047 = vand.u32 2147483647, %v1589
      %v2048 = vand.u32 2147483647, %v1618
      %v2049 = vand.u32 2147483647, %v1647
      %v2050 = vand.u32 2147483647, %v1676
      %v2051 = vand.u32 2147483647, %v1705
      %v2052 = vand.u32 2147483647, %v1734
      %v2053 = vand.u32 2147483647, %v1763
      %v2054 = vand.u32 2147483647, %v1792
      %v2055 = vand.u32 2147483647, %v1821
      %v2056 = vand.u32 2147483647, %v1850
      %v2057 = vand.u32 2147483647, %v1879
      %v2058 = vand.u32 2147483647, %v1908
      %v2059 = vand.u32 2147483647, %v1937
      %v2060 = vand.u32 2147483647, %v1966
      %v2061 = vand.u32 2147483647, %v1995
      %v2062 = vand.u32 2147483647, %v1302
      %v2063 = vand.u32 2147483647, %v1331
      %v2064 = vand.u32 2147483647, %v1360
      %v2065 = vand.u32 2147483647, %v1389
      %v2066 = vand.u32 2147483647, %v1418
      %v2067 = vand.u32 2147483647, %v1447
      %v2068 = vand.u32 2147483647, %v1476
      %v2069 = vand.u32 2147483647, %v1505
      %v2070 = vand.u32 2147483647, %v1534
      %v2071 = vand.u32 2147483647, %v1563
      %v2072 = vand.u32 2147483647, %v1592
      %v2073 = vand.u32 2147483647, %v1621
      %v2074 = vand.u32 2147483647, %v1650
      %v2075 = vand.u32 2147483647, %v1679
      %v2076 = vand.u32 2147483647, %v1708
      %v2077 = vand.u32 2147483647, %v1737
      %v2078 = vand.u32 2147483647, %v1766
      %v2079 = vand.u32 2147483647, %v1795
      %v2080 = vand.u32 2147483647, %v1824
      %v2081 = vand.u32 2147483647, %v1853
      %v2082 = vand.u32 2147483647, %v1882
      %v2083 = vand.u32 2147483647, %v1911
      %v2084 = vand.u32 2147483647, %v1940
      %v2085 = vand.u32 2147483647, %v1969
      %v2086 = vand.u32 2147483647, %v1998
      %v2087 = vand.u32 2147483647, %v1304
      %v2088 = vand.u32 2147483647, %v1333
      %v2089 = vand.u32 2147483647, %v1362
      %v2090 = vand.u32 2147483647, %v1391
      %v2091 = vand.u32 2147483647, %v1420
      %v2092 = vand.u32 2147483647, %v1449
      %v2093 = vand.u32 2147483647, %v1478
      %v2094 = vand.u32 2147483647, %v1507
      %v2095 = vand.u32 2147483647, %v1536
      %v2096 = vand.u32 2147483647, %v1565
      %v2097 = vand.u32 2147483647, %v1594
      %v2098 = vand.u32 2147483647, %v1623
      %v2099 = vand.u32 2147483647, %v1652
      %v2100 = vand.u32 2147483647, %v1681
      %v2101 = vand.u32 2147483647, %v1710
      %v2102 = vand.u32 2147483647, %v1739
      %v2103 = vand.u32 2147483647, %v1768
      %v2104 = vand.u32 2147483647, %v1797
      %v2105 = vand.u32 2147483647, %v1826
      %v2106 = vand.u32 2147483647, %v1855
      %v2107 = vand.u32 2147483647, %v1884
      %v2108 = vand.u32 2147483647, %v1913
      %v2109 = vand.u32 2147483647, %v1942
      %v2110 = vand.u32 2147483647, %v1971
      %v2111 = vand.u32 2147483647, %v2000
      %v2112 = vand.u32 2147483647, %v1307
      %v2113 = vand.u32 2147483647, %v1336
      %v2114 = vand.u32 2147483647, %v1365
      %v2115 = vand.u32 2147483647, %v1394
      %v2116 = vand.u32 2147483647, %v1423
      %v2117 = vand.u32 2147483647, %v1452
      %v2118 = vand.u32 2147483647, %v1481
      %v2119 = vand.u32 2147483647, %v1510
      %v2120 = vand.u32 2147483647, %v1539
      %v2121 = vand.u32 2147483647, %v1568
      %v2122 = vand.u32 2147483647, %v1597
      %v2123 = vand.u32 2147483647, %v1626
      %v2124 = vand.u32 2147483647, %v1655
      %v2125 = vand.u32 2147483647, %v1684
      %v2126 = vand.u32 2147483647, %v1713
      %v2127 = vand.u32 2147483647, %v1742
      %v2128 = vand.u32 2147483647, %v1771
      %v2129 = vand.u32 2147483647, %v1800
      %v2130 = vand.u32 2147483647, %v1829
      %v2131 = vand.u32 2147483647, %v1858
      %v2132 = vand.u32 2147483647, %v1887
      %v2133 = vand.u32 2147483647, %v1916
      %v2134 = vand.u32 2147483647, %v1945
      %v2135 = vand.u32 2147483647, %v1974
      %v2136 = vand.u32 2147483647, %v2003
      %v2137 = vand.u32 2147483647, %v1309
      %v2138 = vand.u32 2147483647, %v1338
      %v2139 = vand.u32 2147483647, %v1367
      %v2140 = vand.u32 2147483647, %v1396
      %v2141 = vand.u32 2147483647, %v1425
      %v2142 = vand.u32 2147483647, %v1454
      %v2143 = vand.u32 2147483647, %v1483
      %v2144 = vand.u32 2147483647, %v1512
      %v2145 = vand.u32 2147483647, %v1541
      %v2146 = vand.u32 2147483647, %v1570
      %v2147 = vand.u32 2147483647, %v1599
      %v2148 = vand.u32 2147483647, %v1628
      %v2149 = vand.u32 2147483647, %v1657
      %v2150 = vand.u32 2147483647, %v1686
      %v2151 = vand.u32 2147483647, %v1715
      %v2152 = vand.u32 2147483647, %v1744
      %v2153 = vand.u32 2147483647, %v1773
      %v2154 = vand.u32 2147483647, %v1802
      %v2155 = vand.u32 2147483647, %v1831
      %v2156 = vand.u32 2147483647, %v1860
      %v2157 = vand.u32 2147483647, %v1889
      %v2158 = vand.u32 2147483647, %v1918
      %v2159 = vand.u32 2147483647, %v1947
      %v2160 = vand.u32 2147483647, %v1976
      %v2161 = vand.u32 2147483647, %v2005
      %v2162 = vand.u32 2147483647, %v1312
      %v2163 = vand.u32 2147483647, %v1341
      %v2164 = vand.u32 2147483647, %v1370
      %v2165 = vand.u32 2147483647, %v1399
      %v2166 = vand.u32 2147483647, %v1428
      %v2167 = vand.u32 2147483647, %v1457
      %v2168 = vand.u32 2147483647, %v1486
      %v2169 = vand.u32 2147483647, %v1515
      %v2170 = vand.u32 2147483647, %v1544
      %v2171 = vand.u32 2147483647, %v1573
      %v2172 = vand.u32 2147483647, %v1602
      %v2173 = vand.u32 2147483647, %v1631
      %v2174 = vand.u32 2147483647, %v1660
      %v2175 = vand.u32 2147483647, %v1689
      %v2176 = vand.u32 2147483647, %v1718
      %v2177 = vand.u32 2147483647, %v1747
      %v2178 = vand.u32 2147483647, %v1776
      %v2179 = vand.u32 2147483647, %v1805
      %v2180 = vand.u32 2147483647, %v1834
      %v2181 = vand.u32 2147483647, %v1863
      %v2182 = vand.u32 2147483647, %v1892
      %v2183 = vand.u32 2147483647, %v1921
      %v2184 = vand.u32 2147483647, %v1950
      %v2185 = vand.u32 2147483647, %v1979
      %v2186 = vand.u32 2147483647, %v2008
      %v2187 = vand.u32 2147483647, %v1314
      %v2188 = vand.u32 2147483647, %v1343
      %v2189 = vand.u32 2147483647, %v1372
      %v2190 = vand.u32 2147483647, %v1401
      %v2191 = vand.u32 2147483647, %v1430
      %v2192 = vand.u32 2147483647, %v1459
      %v2193 = vand.u32 2147483647, %v1488
      %v2194 = vand.u32 2147483647, %v1517
      %v2195 = vand.u32 2147483647, %v1546
      %v2196 = vand.u32 2147483647, %v1575
      %v2197 = vand.u32 2147483647, %v1604
      %v2198 = vand.u32 2147483647, %v1633
      %v2199 = vand.u32 2147483647, %v1662
      %v2200 = vand.u32 2147483647, %v1691
      %v2201 = vand.u32 2147483647, %v1720
      %v2202 = vand.u32 2147483647, %v1749
      %v2203 = vand.u32 2147483647, %v1778
      %v2204 = vand.u32 2147483647, %v1807
      %v2205 = vand.u32 2147483647, %v1836
      %v2206 = vand.u32 2147483647, %v1865
      %v2207 = vand.u32 2147483647, %v1894
      %v2208 = vand.u32 2147483647, %v1923
      %v2209 = vand.u32 2147483647, %v1952
      %v2210 = vand.u32 2147483647, %v1981
      %v2211 = vand.u32 2147483647, %v2010
      %v2212 = vadd.f32 %v2012, %v2013
      %v2213 = vadd.f32 %v2212, %v2014
      %v2214 = vadd.f32 %v2213, %v2015
      %v2215 = vadd.f32 %v2214, %v2016
      %v2216 = vadd.f32 %v2215, %v2017
      %v2217 = vadd.f32 %v2216, %v2018
      %v2218 = vadd.f32 %v2217, %v2019
      %v2219 = vadd.f32 %v2218, %v2020
      %v2220 = vadd.f32 %v2219, %v2021
      %v2221 = vadd.f32 %v2220, %v2022
      %v2222 = vadd.f32 %v2221, %v2023
      %v2223 = vadd.f32 %v2222, %v2024
      %v2224 = vadd.f32 %v2223, %v2025
      %v2225 = vadd.f32 %v2224, %v2026
      %v2226 = vadd.f32 %v2225, %v2027
      %v2227 = vadd.f32 %v2226, %v2028
      %v2228 = vadd.f32 %v2227, %v2029
      %v2229 = vadd.f32 %v2228, %v2030
      %v2230 = vadd.f32 %v2229, %v2031
      %v2231 = vadd.f32 %v2230, %v2032
      %v2232 = vadd.f32 %v2231, %v2033
      %v2233 = vadd.f32 %v2232, %v2034
      %v2234 = vadd.f32 %v2233, %v2035
      %v2235 = vadd.f32 %v2234, %v2036
      %2236 = vadd.xlane.f32.xlu0 %v2235
      %v2237 = vpop.xlane.xlu0 %2236
      %v2238 = vadd.f32 %v2037, %v2038
      %v2239 = vadd.f32 %v2238, %v2039
      %v2240 = vadd.f32 %v2239, %v2040
      %v2241 = vadd.f32 %v2240, %v2041
      %v2242 = vadd.f32 %v2241, %v2042
      %v2243 = vadd.f32 %v2242, %v2043
      %v2244 = vadd.f32 %v2243, %v2044
      %v2245 = vadd.f32 %v2244, %v2045
      %v2246 = vadd.f32 %v2245, %v2046
      %v2247 = vadd.f32 %v2246, %v2047
      %v2248 = vadd.f32 %v2247, %v2048
      %v2249 = vadd.f32 %v2248, %v2049
      %v2250 = vadd.f32 %v2249, %v2050
      %v2251 = vadd.f32 %v2250, %v2051
      %v2252 = vadd.f32 %v2251, %v2052
      %v2253 = vadd.f32 %v2252, %v2053
      %v2254 = vadd.f32 %v2253, %v2054
      %v2255 = vadd.f32 %v2254, %v2055
      %v2256 = vadd.f32 %v2255, %v2056
      %v2257 = vadd.f32 %v2256, %v2057
      %v2258 = vadd.f32 %v2257, %v2058
      %v2259 = vadd.f32 %v2258, %v2059
      %v2260 = vadd.f32 %v2259, %v2060
      %v2261 = vadd.f32 %v2260, %v2061
      %2262 = vadd.xlane.f32.xlu0 %v2261
      %v2263 = vpop.xlane.xlu0 %2262
      %v2264 = vadd.f32 %v2062, %v2063
      %v2265 = vadd.f32 %v2264, %v2064
      %v2266 = vadd.f32 %v2265, %v2065
      %v2267 = vadd.f32 %v2266, %v2066
      %v2268 = vadd.f32 %v2267, %v2067
      %v2269 = vadd.f32 %v2268, %v2068
      %v2270 = vadd.f32 %v2269, %v2069
      %v2271 = vadd.f32 %v2270, %v2070
      %v2272 = vadd.f32 %v2271, %v2071
      %v2273 = vadd.f32 %v2272, %v2072
      %v2274 = vadd.f32 %v2273, %v2073
      %v2275 = vadd.f32 %v2274, %v2074
      %v2276 = vadd.f32 %v2275, %v2075
      %v2277 = vadd.f32 %v2276, %v2076
      %v2278 = vadd.f32 %v2277, %v2077
      %v2279 = vadd.f32 %v2278, %v2078
      %v2280 = vadd.f32 %v2279, %v2079
      %v2281 = vadd.f32 %v2280, %v2080
      %v2282 = vadd.f32 %v2281, %v2081
      %v2283 = vadd.f32 %v2282, %v2082
      %v2284 = vadd.f32 %v2283, %v2083
      %v2285 = vadd.f32 %v2284, %v2084
      %v2286 = vadd.f32 %v2285, %v2085
      %v2287 = vadd.f32 %v2286, %v2086
      %2288 = vadd.xlane.f32.xlu0 %v2287
      %v2289 = vpop.xlane.xlu0 %2288
      %v2290 = vadd.f32 %v2087, %v2088
      %v2291 = vadd.f32 %v2290, %v2089
      %v2292 = vadd.f32 %v2291, %v2090
      %v2293 = vadd.f32 %v2292, %v2091
      %v2294 = vadd.f32 %v2293, %v2092
      %v2295 = vadd.f32 %v2294, %v2093
      %v2296 = vadd.f32 %v2295, %v2094
      %v2297 = vadd.f32 %v2296, %v2095
      %v2298 = vadd.f32 %v2297, %v2096
      %v2299 = vadd.f32 %v2298, %v2097
      %v2300 = vadd.f32 %v2299, %v2098
      %v2301 = vadd.f32 %v2300, %v2099
      %v2302 = vadd.f32 %v2301, %v2100
      %v2303 = vadd.f32 %v2302, %v2101
      %v2304 = vadd.f32 %v2303, %v2102
      %v2305 = vadd.f32 %v2304, %v2103
      %v2306 = vadd.f32 %v2305, %v2104
      %v2307 = vadd.f32 %v2306, %v2105
      %v2308 = vadd.f32 %v2307, %v2106
      %v2309 = vadd.f32 %v2308, %v2107
      %v2310 = vadd.f32 %v2309, %v2108
      %v2311 = vadd.f32 %v2310, %v2109
      %v2312 = vadd.f32 %v2311, %v2110
      %v2313 = vadd.f32 %v2312, %v2111
      %2314 = vadd.xlane.f32.xlu0 %v2313
      %v2315 = vpop.xlane.xlu0 %2314
      %v2316 = vadd.f32 %v2112, %v2113
      %v2317 = vadd.f32 %v2316, %v2114
      %v2318 = vadd.f32 %v2317, %v2115
      %v2319 = vadd.f32 %v2318, %v2116
      %v2320 = vadd.f32 %v2319, %v2117
      %v2321 = vadd.f32 %v2320, %v2118
      %v2322 = vadd.f32 %v2321, %v2119
      %v2323 = vadd.f32 %v2322, %v2120
      %v2324 = vadd.f32 %v2323, %v2121
      %v2325 = vadd.f32 %v2324, %v2122
      %v2326 = vadd.f32 %v2325, %v2123
      %v2327 = vadd.f32 %v2326, %v2124
      %v2328 = vadd.f32 %v2327, %v2125
      %v2329 = vadd.f32 %v2328, %v2126
      %v2330 = vadd.f32 %v2329, %v2127
      %v2331 = vadd.f32 %v2330, %v2128
      %v2332 = vadd.f32 %v2331, %v2129
      %v2333 = vadd.f32 %v2332, %v2130
      %v2334 = vadd.f32 %v2333, %v2131
      %v2335 = vadd.f32 %v2334, %v2132
      %v2336 = vadd.f32 %v2335, %v2133
      %v2337 = vadd.f32 %v2336, %v2134
      %v2338 = vadd.f32 %v2337, %v2135
      %v2339 = vadd.f32 %v2338, %v2136
      %2340 = vadd.xlane.f32.xlu0 %v2339
      %v2341 = vpop.xlane.xlu0 %2340
      %v2342 = vadd.f32 %v2137, %v2138
      %v2343 = vadd.f32 %v2342, %v2139
      %v2344 = vadd.f32 %v2343, %v2140
      %v2345 = vadd.f32 %v2344, %v2141
      %v2346 = vadd.f32 %v2345, %v2142
      %v2347 = vadd.f32 %v2346, %v2143
      %v2348 = vadd.f32 %v2347, %v2144
      %v2349 = vadd.f32 %v2348, %v2145
      %v2350 = vadd.f32 %v2349, %v2146
      %v2351 = vadd.f32 %v2350, %v2147
      %v2352 = vadd.f32 %v2351, %v2148
      %v2353 = vadd.f32 %v2352, %v2149
      %v2354 = vadd.f32 %v2353, %v2150
      %v2355 = vadd.f32 %v2354, %v2151
      %v2356 = vadd.f32 %v2355, %v2152
      %v2357 = vadd.f32 %v2356, %v2153
      %v2358 = vadd.f32 %v2357, %v2154
      %v2359 = vadd.f32 %v2358, %v2155
      %v2360 = vadd.f32 %v2359, %v2156
      %v2361 = vadd.f32 %v2360, %v2157
      %v2362 = vadd.f32 %v2361, %v2158
      %v2363 = vadd.f32 %v2362, %v2159
      %v2364 = vadd.f32 %v2363, %v2160
      %v2365 = vadd.f32 %v2364, %v2161
      %2366 = vadd.xlane.f32.xlu0 %v2365
      %v2367 = vpop.xlane.xlu0 %2366
      %v2368 = vadd.f32 %v2162, %v2163
      %v2369 = vadd.f32 %v2368, %v2164
      %v2370 = vadd.f32 %v2369, %v2165
      %v2371 = vadd.f32 %v2370, %v2166
      %v2372 = vadd.f32 %v2371, %v2167
      %v2373 = vadd.f32 %v2372, %v2168
      %v2374 = vadd.f32 %v2373, %v2169
      %v2375 = vadd.f32 %v2374, %v2170
      %v2376 = vadd.f32 %v2375, %v2171
      %v2377 = vadd.f32 %v2376, %v2172
      %v2378 = vadd.f32 %v2377, %v2173
      %v2379 = vadd.f32 %v2378, %v2174
      %v2380 = vadd.f32 %v2379, %v2175
      %v2381 = vadd.f32 %v2380, %v2176
      %v2382 = vadd.f32 %v2381, %v2177
      %v2383 = vadd.f32 %v2382, %v2178
      %v2384 = vadd.f32 %v2383, %v2179
      %v2385 = vadd.f32 %v2384, %v2180
      %v2386 = vadd.f32 %v2385, %v2181
      %v2387 = vadd.f32 %v2386, %v2182
      %v2388 = vadd.f32 %v2387, %v2183
      %v2389 = vadd.f32 %v2388, %v2184
      %v2390 = vadd.f32 %v2389, %v2185
      %v2391 = vadd.f32 %v2390, %v2186
      %2392 = vadd.xlane.f32.xlu0 %v2391
      %v2393 = vpop.xlane.xlu0 %2392
      %v2394 = vadd.f32 %v2187, %v2188
      %v2395 = vadd.f32 %v2394, %v2189
      %v2396 = vadd.f32 %v2395, %v2190
      %v2397 = vadd.f32 %v2396, %v2191
      %v2398 = vadd.f32 %v2397, %v2192
      %v2399 = vadd.f32 %v2398, %v2193
      %v2400 = vadd.f32 %v2399, %v2194
      %v2401 = vadd.f32 %v2400, %v2195
      %v2402 = vadd.f32 %v2401, %v2196
      %v2403 = vadd.f32 %v2402, %v2197
      %v2404 = vadd.f32 %v2403, %v2198
      %v2405 = vadd.f32 %v2404, %v2199
      %v2406 = vadd.f32 %v2405, %v2200
      %v2407 = vadd.f32 %v2406, %v2201
      %v2408 = vadd.f32 %v2407, %v2202
      %v2409 = vadd.f32 %v2408, %v2203
      %v2410 = vadd.f32 %v2409, %v2204
      %v2411 = vadd.f32 %v2410, %v2205
      %v2412 = vadd.f32 %v2411, %v2206
      %v2413 = vadd.f32 %v2412, %v2207
      %v2414 = vadd.f32 %v2413, %v2208
      %v2415 = vadd.f32 %v2414, %v2209
      %v2416 = vadd.f32 %v2415, %v2210
      %v2417 = vadd.f32 %v2416, %v2211
      %2418 = vadd.xlane.f32.xlu0 %v2417
      %v2419 = vpop.xlane.xlu0 %2418
      %v2420 = vmul.f32 %v2237, 0.00031887754
      %v2421 = vmul.f32 %v2263, 0.00031887754
      %v2422 = vmul.f32 %v2289, 0.00031887754
      %v2423 = vmul.f32 %v2315, 0.00031887754
      %v2424 = vmul.f32 %v2341, 0.00031887754
      %v2425 = vmul.f32 %v2367, 0.00031887754
      %v2426 = vmul.f32 %v2393, 0.00031887754
      %v2427 = vmul.f32 %v2419, 0.00031887754
      %v2428 = vunpack.c.l.bf16 %v420
      %v2429 = vunpack.c.h.bf16 %v420
      %v2430 = vunpack.c.l.bf16 %v421
      %v2431 = vunpack.c.h.bf16 %v421
      %v2432 = vunpack.c.l.bf16 %v422
      %v2433 = vunpack.c.h.bf16 %v422
      %v2434 = vunpack.c.l.bf16 %v423
      %v2435 = vunpack.c.h.bf16 %v423
      %v2436 = vunpack.c.l.bf16 %v424
      %v2437 = vunpack.c.h.bf16 %v424
      %v2438 = vunpack.c.l.bf16 %v425
      %v2439 = vunpack.c.h.bf16 %v425
      %v2440 = vunpack.c.l.bf16 %v426
      %v2441 = vunpack.c.h.bf16 %v426
      %v2442 = vunpack.c.l.bf16 %v427
      %v2443 = vunpack.c.h.bf16 %v427
      %v2444 = vunpack.c.l.bf16 %v428
      %v2445 = vunpack.c.h.bf16 %v428
      %v2446 = vunpack.c.l.bf16 %v429
      %v2447 = vunpack.c.h.bf16 %v429
      %v2448 = vunpack.c.l.bf16 %v430
      %v2449 = vunpack.c.h.bf16 %v430
      %v2450 = vunpack.c.l.bf16 %v431
      %v2451 = vunpack.c.h.bf16 %v431
      %v2452 = vunpack.c.l.bf16 %v432
      %v2453 = vunpack.c.l.bf16 %v433
      %v2454 = vunpack.c.h.bf16 %v433
      %v2455 = vunpack.c.l.bf16 %v434
      %v2456 = vunpack.c.h.bf16 %v434
      %v2457 = vunpack.c.l.bf16 %v435
      %v2458 = vunpack.c.h.bf16 %v435
      %v2459 = vunpack.c.l.bf16 %v436
      %v2460 = vunpack.c.h.bf16 %v436
      %v2461 = vunpack.c.l.bf16 %v437
      %v2462 = vunpack.c.h.bf16 %v437
      %v2463 = vunpack.c.l.bf16 %v438
      %v2464 = vunpack.c.h.bf16 %v438
      %v2465 = vunpack.c.l.bf16 %v439
      %v2466 = vunpack.c.h.bf16 %v439
      %v2467 = vunpack.c.l.bf16 %v440
      %v2468 = vunpack.c.h.bf16 %v440
      %v2469 = vunpack.c.l.bf16 %v441
      %v2470 = vunpack.c.h.bf16 %v441
      %v2471 = vunpack.c.l.bf16 %v442
      %v2472 = vunpack.c.h.bf16 %v442
      %v2473 = vunpack.c.l.bf16 %v443
      %v2474 = vunpack.c.h.bf16 %v443
      %v2475 = vunpack.c.l.bf16 %v444
      %v2476 = vunpack.c.h.bf16 %v444
      %v2477 = vunpack.c.l.bf16 %v445
      %v2478 = vunpack.c.l.bf16 %v446
      %v2479 = vunpack.c.h.bf16 %v446
      %v2480 = vunpack.c.l.bf16 %v447
      %v2481 = vunpack.c.h.bf16 %v447
      %v2482 = vunpack.c.l.bf16 %v448
      %v2483 = vunpack.c.h.bf16 %v448
      %v2484 = vunpack.c.l.bf16 %v449
      %v2485 = vunpack.c.h.bf16 %v449
      %v2486 = vunpack.c.l.bf16 %v450
      %v2487 = vunpack.c.h.bf16 %v450
      %v2488 = vunpack.c.l.bf16 %v451
      %v2489 = vunpack.c.h.bf16 %v451
      %v2490 = vunpack.c.l.bf16 %v452
      %v2491 = vunpack.c.h.bf16 %v452
      %v2492 = vunpack.c.l.bf16 %v453
      %v2493 = vunpack.c.h.bf16 %v453
      %v2494 = vunpack.c.l.bf16 %v454
      %v2495 = vunpack.c.h.bf16 %v454
      %v2496 = vunpack.c.l.bf16 %v455
      %v2497 = vunpack.c.h.bf16 %v455
      %v2498 = vunpack.c.l.bf16 %v456
      %v2499 = vunpack.c.h.bf16 %v456
      %v2500 = vunpack.c.l.bf16 %v457
      %v2501 = vunpack.c.h.bf16 %v457
      %v2502 = vunpack.c.l.bf16 %v458
      %v2503 = vunpack.c.l.bf16 %v459
      %v2504 = vunpack.c.h.bf16 %v459
      %v2505 = vunpack.c.l.bf16 %v460
      %v2506 = vunpack.c.h.bf16 %v460
      %v2507 = vunpack.c.l.bf16 %v461
      %v2508 = vunpack.c.h.bf16 %v461
      %v2509 = vunpack.c.l.bf16 %v462
      %v2510 = vunpack.c.h.bf16 %v462
      %v2511 = vunpack.c.l.bf16 %v463
      %v2512 = vunpack.c.h.bf16 %v463
      %v2513 = vunpack.c.l.bf16 %v464
      %v2514 = vunpack.c.h.bf16 %v464
      %v2515 = vunpack.c.l.bf16 %v465
      %v2516 = vunpack.c.h.bf16 %v465
      %v2517 = vunpack.c.l.bf16 %v466
      %v2518 = vunpack.c.h.bf16 %v466
      %v2519 = vunpack.c.l.bf16 %v467
      %v2520 = vunpack.c.h.bf16 %v467
      %v2521 = vunpack.c.l.bf16 %v468
      %v2522 = vunpack.c.h.bf16 %v468
      %v2523 = vunpack.c.l.bf16 %v469
      %v2524 = vunpack.c.h.bf16 %v469
      %v2525 = vunpack.c.l.bf16 %v470
      %v2526 = vunpack.c.h.bf16 %v470
      %v2527 = vunpack.c.l.bf16 %v471
      %v2528 = vunpack.c.l.bf16 %v472
      %v2529 = vunpack.c.h.bf16 %v472
      %v2530 = vunpack.c.l.bf16 %v473
      %v2531 = vunpack.c.h.bf16 %v473
      %v2532 = vunpack.c.l.bf16 %v474
      %v2533 = vunpack.c.h.bf16 %v474
      %v2534 = vunpack.c.l.bf16 %v475
      %v2535 = vunpack.c.h.bf16 %v475
      %v2536 = vunpack.c.l.bf16 %v476
      %v2537 = vunpack.c.h.bf16 %v476
      %v2538 = vunpack.c.l.bf16 %v477
      %v2539 = vunpack.c.h.bf16 %v477
      %v2540 = vunpack.c.l.bf16 %v478
      %v2541 = vunpack.c.h.bf16 %v478
      %v2542 = vunpack.c.l.bf16 %v479
      %v2543 = vunpack.c.h.bf16 %v479
      %v2544 = vunpack.c.l.bf16 %v480
      %v2545 = vunpack.c.h.bf16 %v480
      %v2546 = vunpack.c.l.bf16 %v481
      %v2547 = vunpack.c.h.bf16 %v481
      %v2548 = vunpack.c.l.bf16 %v482
      %v2549 = vunpack.c.h.bf16 %v482
      %v2550 = vunpack.c.l.bf16 %v483
      %v2551 = vunpack.c.h.bf16 %v483
      %v2552 = vunpack.c.l.bf16 %v484
      %v2553 = vunpack.c.l.bf16 %v485
      %v2554 = vunpack.c.h.bf16 %v485
      %v2555 = vunpack.c.l.bf16 %v486
      %v2556 = vunpack.c.h.bf16 %v486
      %v2557 = vunpack.c.l.bf16 %v487
      %v2558 = vunpack.c.h.bf16 %v487
      %v2559 = vunpack.c.l.bf16 %v488
      %v2560 = vunpack.c.h.bf16 %v488
      %v2561 = vunpack.c.l.bf16 %v489
      %v2562 = vunpack.c.h.bf16 %v489
      %v2563 = vunpack.c.l.bf16 %v490
      %v2564 = vunpack.c.h.bf16 %v490
      %v2565 = vunpack.c.l.bf16 %v491
      %v2566 = vunpack.c.h.bf16 %v491
      %v2567 = vunpack.c.l.bf16 %v492
      %v2568 = vunpack.c.h.bf16 %v492
      %v2569 = vunpack.c.l.bf16 %v493
      %v2570 = vunpack.c.h.bf16 %v493
      %v2571 = vunpack.c.l.bf16 %v494
      %v2572 = vunpack.c.h.bf16 %v494
      %v2573 = vunpack.c.l.bf16 %v495
      %v2574 = vunpack.c.h.bf16 %v495
      %v2575 = vunpack.c.l.bf16 %v496
      %v2576 = vunpack.c.h.bf16 %v496
      %v2577 = vunpack.c.l.bf16 %v497
      %v2578 = vadd.f32 %v2428, %v2429
      %v2579 = vadd.f32 %v2578, %v2430
      %v2580 = vadd.f32 %v2579, %v2431
      %v2581 = vadd.f32 %v2580, %v2432
      %v2582 = vadd.f32 %v2581, %v2433
      %v2583 = vadd.f32 %v2582, %v2434
      %v2584 = vadd.f32 %v2583, %v2435
      %v2585 = vadd.f32 %v2584, %v2436
      %v2586 = vadd.f32 %v2585, %v2437
      %v2587 = vadd.f32 %v2586, %v2438
      %v2588 = vadd.f32 %v2587, %v2439
      %v2589 = vadd.f32 %v2588, %v2440
      %v2590 = vadd.f32 %v2589, %v2441
      %v2591 = vadd.f32 %v2590, %v2442
      %v2592 = vadd.f32 %v2591, %v2443
      %v2593 = vadd.f32 %v2592, %v2444
      %v2594 = vadd.f32 %v2593, %v2445
      %v2595 = vadd.f32 %v2594, %v2446
      %v2596 = vadd.f32 %v2595, %v2447
      %v2597 = vadd.f32 %v2596, %v2448
      %v2598 = vadd.f32 %v2597, %v2449
      %v2599 = vadd.f32 %v2598, %v2450
      %v2600 = vadd.f32 %v2599, %v2451
      %v2601 = vadd.f32 %v2600, %v2452
      %2602 = vadd.xlane.f32.xlu0 %v2601
      %v2603 = vpop.xlane.xlu0 %2602
      %v2604 = vadd.f32 %v2453, %v2454
      %v2605 = vadd.f32 %v2604, %v2455
      %v2606 = vadd.f32 %v2605, %v2456
      %v2607 = vadd.f32 %v2606, %v2457
      %v2608 = vadd.f32 %v2607, %v2458
      %v2609 = vadd.f32 %v2608, %v2459
      %v2610 = vadd.f32 %v2609, %v2460
      %v2611 = vadd.f32 %v2610, %v2461
      %v2612 = vadd.f32 %v2611, %v2462
      %v2613 = vadd.f32 %v2612, %v2463
      %v2614 = vadd.f32 %v2613, %v2464
      %v2615 = vadd.f32 %v2614, %v2465
      %v2616 = vadd.f32 %v2615, %v2466
      %v2617 = vadd.f32 %v2616, %v2467
      %v2618 = vadd.f32 %v2617, %v2468
      %v2619 = vadd.f32 %v2618, %v2469
      %v2620 = vadd.f32 %v2619, %v2470
      %v2621 = vadd.f32 %v2620, %v2471
      %v2622 = vadd.f32 %v2621, %v2472
      %v2623 = vadd.f32 %v2622, %v2473
      %v2624 = vadd.f32 %v2623, %v2474
      %v2625 = vadd.f32 %v2624, %v2475
      %v2626 = vadd.f32 %v2625, %v2476
      %v2627 = vadd.f32 %v2626, %v2477
      %2628 = vadd.xlane.f32.xlu0 %v2627
      %v2629 = vpop.xlane.xlu0 %2628
      %v2630 = vadd.f32 %v2478, %v2479
      %v2631 = vadd.f32 %v2630, %v2480
      %v2632 = vadd.f32 %v2631, %v2481
      %v2633 = vadd.f32 %v2632, %v2482
      %v2634 = vadd.f32 %v2633, %v2483
      %v2635 = vadd.f32 %v2634, %v2484
      %v2636 = vadd.f32 %v2635, %v2485
      %v2637 = vadd.f32 %v2636, %v2486
      %v2638 = vadd.f32 %v2637, %v2487
      %v2639 = vadd.f32 %v2638, %v2488
      %v2640 = vadd.f32 %v2639, %v2489
      %v2641 = vadd.f32 %v2640, %v2490
      %v2642 = vadd.f32 %v2641, %v2491
      %v2643 = vadd.f32 %v2642, %v2492
      %v2644 = vadd.f32 %v2643, %v2493
      %v2645 = vadd.f32 %v2644, %v2494
      %v2646 = vadd.f32 %v2645, %v2495
      %v2647 = vadd.f32 %v2646, %v2496
      %v2648 = vadd.f32 %v2647, %v2497
      %v2649 = vadd.f32 %v2648, %v2498
      %v2650 = vadd.f32 %v2649, %v2499
      %v2651 = vadd.f32 %v2650, %v2500
      %v2652 = vadd.f32 %v2651, %v2501
      %v2653 = vadd.f32 %v2652, %v2502
      %2654 = vadd.xlane.f32.xlu0 %v2653
      %v2655 = vpop.xlane.xlu0 %2654
      %v2656 = vadd.f32 %v2503, %v2504
      %v2657 = vadd.f32 %v2656, %v2505
      %v2658 = vadd.f32 %v2657, %v2506
      %v2659 = vadd.f32 %v2658, %v2507
      %v2660 = vadd.f32 %v2659, %v2508
      %v2661 = vadd.f32 %v2660, %v2509
      %v2662 = vadd.f32 %v2661, %v2510
      %v2663 = vadd.f32 %v2662, %v2511
      %v2664 = vadd.f32 %v2663, %v2512
      %v2665 = vadd.f32 %v2664, %v2513
      %v2666 = vadd.f32 %v2665, %v2514
      %v2667 = vadd.f32 %v2666, %v2515
      %v2668 = vadd.f32 %v2667, %v2516
      %v2669 = vadd.f32 %v2668, %v2517
      %v2670 = vadd.f32 %v2669, %v2518
      %v2671 = vadd.f32 %v2670, %v2519
      %v2672 = vadd.f32 %v2671, %v2520
      %v2673 = vadd.f32 %v2672, %v2521
      %v2674 = vadd.f32 %v2673, %v2522
      %v2675 = vadd.f32 %v2674, %v2523
      %v2676 = vadd.f32 %v2675, %v2524
      %v2677 = vadd.f32 %v2676, %v2525
      %v2678 = vadd.f32 %v2677, %v2526
      %v2679 = vadd.f32 %v2678, %v2527
      %2680 = vadd.xlane.f32.xlu0 %v2679
      %v2681 = vpop.xlane.xlu0 %2680
      %v2682 = vadd.f32 %v2528, %v2529
      %v2683 = vadd.f32 %v2682, %v2530
      %v2684 = vadd.f32 %v2683, %v2531
      %v2685 = vadd.f32 %v2684, %v2532
      %v2686 = vadd.f32 %v2685, %v2533
      %v2687 = vadd.f32 %v2686, %v2534
      %v2688 = vadd.f32 %v2687, %v2535
      %v2689 = vadd.f32 %v2688, %v2536
      %v2690 = vadd.f32 %v2689, %v2537
      %v2691 = vadd.f32 %v2690, %v2538
      %v2692 = vadd.f32 %v2691, %v2539
      %v2693 = vadd.f32 %v2692, %v2540
      %v2694 = vadd.f32 %v2693, %v2541
      %v2695 = vadd.f32 %v2694, %v2542
      %v2696 = vadd.f32 %v2695, %v2543
      %v2697 = vadd.f32 %v2696, %v2544
      %v2698 = vadd.f32 %v2697, %v2545
      %v2699 = vadd.f32 %v2698, %v2546
      %v2700 = vadd.f32 %v2699, %v2547
      %v2701 = vadd.f32 %v2700, %v2548
      %v2702 = vadd.f32 %v2701, %v2549
      %v2703 = vadd.f32 %v2702, %v2550
      %v2704 = vadd.f32 %v2703, %v2551
      %v2705 = vadd.f32 %v2704, %v2552
      %2706 = vadd.xlane.f32.xlu0 %v2705
      %v2707 = vpop.xlane.xlu0 %2706
      %v2708 = vadd.f32 %v2553, %v2554
      %v2709 = vadd.f32 %v2708, %v2555
      %v2710 = vadd.f32 %v2709, %v2556
      %v2711 = vadd.f32 %v2710, %v2557
      %v2712 = vadd.f32 %v2711, %v2558
      %v2713 = vadd.f32 %v2712, %v2559
      %v2714 = vadd.f32 %v2713, %v2560
      %v2715 = vadd.f32 %v2714, %v2561
      %v2716 = vadd.f32 %v2715, %v2562
      %v2717 = vadd.f32 %v2716, %v2563
      %v2718 = vadd.f32 %v2717, %v2564
      %v2719 = vadd.f32 %v2718, %v2565
      %v2720 = vadd.f32 %v2719, %v2566
      %v2721 = vadd.f32 %v2720, %v2567
      %v2722 = vadd.f32 %v2721, %v2568
      %v2723 = vadd.f32 %v2722, %v2569
      %v2724 = vadd.f32 %v2723, %v2570
      %v2725 = vadd.f32 %v2724, %v2571
      %v2726 = vadd.f32 %v2725, %v2572
      %v2727 = vadd.f32 %v2726, %v2573
      %v2728 = vadd.f32 %v2727, %v2574
      %v2729 = vadd.f32 %v2728, %v2575
      %v2730 = vadd.f32 %v2729, %v2576
      %v2731 = vadd.f32 %v2730, %v2577
      %2732 = vadd.xlane.f32.xlu0 %v2731
      %v2733 = vpop.xlane.xlu0 %2732
      %v2734 = vmul.f32 %v2603, 0.00031887754
      %v2735 = vmul.f32 %v2629, 0.00031887754
      %v2736 = vmul.f32 %v2655, 0.00031887754
      %v2737 = vmul.f32 %v2681, 0.00031887754
      %v2738 = vmul.f32 %v2707, 0.00031887754
      %v2739 = vmul.f32 %v2733, 0.00031887754
      %vm2740 = vcmp.eq.s32.totalorder %v341, 0
      %v2741 = vsel %vm2740, 1, 0
      %v2742 = vcvt.s32.f32 %v2741
      %v2743 = vmul.f32 %v2420, %v2742
      %v2744 = vmul.f32 %v2421, %v2742
      %v2745 = vmul.f32 %v2422, %v2742
      %v2746 = vmul.f32 %v2423, %v2742
      %v2747 = vmul.f32 %v2424, %v2742
      %v2748 = vmul.f32 %v2425, %v2742
      %v2749 = vmul.f32 %v2426, %v2742
      %v2750 = vmul.f32 %v2427, %v2742
      %v2751 = vadd.f32 %v2743, 0.0
      %v2752 = vadd.f32 %v2744, 0.0
      %v2753 = vadd.f32 %v2745, 0.0
      %v2754 = vadd.f32 %v2746, 0.0
      %v2755 = vadd.f32 %v2747, 0.0
      %v2756 = vadd.f32 %v2748, 0.0
      %v2757 = vadd.f32 %v2749, 0.0
      %v2758 = vadd.f32 %v2750, 0.0
      %v2759 = vmul.f32 %v2734, %v2742
      %v2760 = vmul.f32 %v2735, %v2742
      %v2761 = vmul.f32 %v2736, %v2742
      %v2762 = vmul.f32 %v2737, %v2742
      %v2763 = vmul.f32 %v2738, %v2742
      %v2764 = vmul.f32 %v2739, %v2742
      %v2765 = vadd.f32 %v2759, 0.0
      %v2766 = vadd.f32 %v2760, 0.0
      %v2767 = vadd.f32 %v2761, 0.0
      %v2768 = vadd.f32 %v2762, 0.0
      %v2769 = vadd.f32 %v2763, 0.0
      %v2770 = vadd.f32 %v2764, 0.0
      %v2771 = vld [vmem:[%s2] sm:$0xff]
      %v2772 = vld [vmem:[%s2 + $0x8] sm:$0xff]
      %v2773 = vld [vmem:[%s2 + $0x10] sm:$0xff]
      %v2774 = vld [vmem:[%s2 + $0x18] sm:$0xff]
      %v2775 = vld [vmem:[%s2 + $0x20] sm:$0xff]
      %v2776 = vld [vmem:[%s2 + $0x28] sm:$0xff]
      %v2777 = vld [vmem:[%s2 + $0x30] sm:$0xff]
      %v2778 = vld [vmem:[%s2 + $0x38] sm:$0xff]
      %v2779 = vld [vmem:[%s3] sm:$0xff]
      %v2780 = vld [vmem:[%s3 + $0x8] sm:$0xff]
      %v2781 = vld [vmem:[%s3 + $0x10] sm:$0xff]
      %v2782 = vld [vmem:[%s3 + $0x18] sm:$0xff]
      %v2783 = vld [vmem:[%s3 + $0x20] sm:$0xff]
      %v2784 = vld [vmem:[%s3 + $0x28] sm:$0xff]
      %v2785 = vld [vmem:[%s3 + $0x30] sm:$0xff]
      %v2786 = vld [vmem:[%s3 + $0x38] sm:$0xff]
      %vm2787 = vcmask 392192
      %v2789 = vsel %vm2787, %v2771, 0
      %v2792 = vsel %vm2787, %v2772, 0
      %v2795 = vsel %vm2787, %v2773, 0
      %v2798 = vsel %vm2787, %v2774, 0
      %v2801 = vsel %vm2787, %v2775, 0
      %v2804 = vsel %vm2787, %v2776, 0
      %v2807 = vsel %vm2787, %v2777, 0
      %v2810 = vsel %vm2787, %v2778, 0
      %2812 = vmatpush.msra.mxu0 0.0
      %2813 = vmatpush.msra.mxu0 0.0
      %2814 = vmatpush.msra.mxu0 0.0
      %2815 = vmatpush.msra.mxu0 0.0
      %2816 = vmatpush.msra.mxu0 0.0
      %2817 = vmatpush.msra.mxu0 0.0
      %2818 = vmatpush.msra.mxu0 0.0
      %2819 = vmatpush.msra.mxu0 0.0
      %2820 = vmatpush.msra.mxu0 0.0
      %2821 = vmatpush.msra.mxu0 0.0
      %2822 = vmatpush.msra.mxu0 %v2770
      %2823 = vmatpush.msra.mxu0 %v2769
      %2824 = vmatpush.msra.mxu0 %v2768
      %2825 = vmatpush.msra.mxu0 %v2767
      %2826 = vmatpush.msra.mxu0 %v2766
      %2827 = vmatpush.msra.mxu0 %v2765
      %2828 = vmatmul.f32.gmra.mxu0 %v2789
      %v2829 = vpop.f32.mrf.mxu0
      %v2830 = vadd.f32 %v2779, %v2829
      %2831 = vmatmul.f32.gmra.mxu0 %v2792
      %v2832 = vpop.f32.mrf.mxu0
      %v2833 = vadd.f32 %v2780, %v2832
      %2834 = vmatmul.f32.gmra.mxu0 %v2795
      %v2835 = vpop.f32.mrf.mxu0
      %v2836 = vadd.f32 %v2781, %v2835
      %2837 = vmatmul.f32.gmra.mxu0 %v2798
      %v2838 = vpop.f32.mrf.mxu0
      %v2839 = vadd.f32 %v2782, %v2838
      %2840 = vmatmul.f32.gmra.mxu0 %v2801
      %v2841 = vpop.f32.mrf.mxu0
      %v2842 = vadd.f32 %v2783, %v2841
      %2843 = vmatmul.f32.gmra.mxu0 %v2804
      %v2844 = vpop.f32.mrf.mxu0
      %v2845 = vadd.f32 %v2784, %v2844
      %2846 = vmatmul.f32.gmra.mxu0 %v2807
      %v2847 = vpop.f32.mrf.mxu0
      %v2848 = vadd.f32 %v2785, %v2847
      %2849 = vmatmul.f32.gmra.mxu0 %v2810
      %v2850 = vpop.f32.mrf.mxu0
      %v2851 = vadd.f32 %v2786, %v2850
      %2852 = vdwg.mxu0
      %v2853 = vld [vmem:[%s4] sm:$0xff]
      %v2854 = vld [vmem:[%s4 + $0x8] sm:$0xff]
      %v2855 = vld [vmem:[%s4 + $0x10] sm:$0xff]
      %v2856 = vld [vmem:[%s4 + $0x18] sm:$0xff]
      %v2857 = vld [vmem:[%s4 + $0x20] sm:$0xff]
      %v2858 = vld [vmem:[%s4 + $0x28] sm:$0xff]
      %v2859 = vld [vmem:[%s4 + $0x30] sm:$0xff]
      %v2860 = vld [vmem:[%s4 + $0x38] sm:$0xff]
      %v2861 = vld [vmem:[%s5] sm:$0xff]
      %v2862 = vld [vmem:[%s5 + $0x8] sm:$0xff]
      %v2863 = vld [vmem:[%s5 + $0x10] sm:$0xff]
      %v2864 = vld [vmem:[%s5 + $0x18] sm:$0xff]
      %v2865 = vld [vmem:[%s5 + $0x20] sm:$0xff]
      %v2866 = vld [vmem:[%s5 + $0x28] sm:$0xff]
      %v2867 = vld [vmem:[%s5 + $0x30] sm:$0xff]
      %v2868 = vld [vmem:[%s5 + $0x38] sm:$0xff]
      %vm2869 = vcmask 523264
      %v2871 = vsel %vm2869, %v2861, 0
      %v2874 = vsel %vm2869, %v2862, 0
      %v2877 = vsel %vm2869, %v2863, 0
      %v2880 = vsel %vm2869, %v2864, 0
      %v2883 = vsel %vm2869, %v2865, 0
      %v2886 = vsel %vm2869, %v2866, 0
      %v2889 = vsel %vm2869, %v2867, 0
      %v2892 = vsel %vm2869, %v2868, 0
      %2894 = vmatpush.msra.mxu0 0.0
      %2895 = vmatpush.msra.mxu0 0.0
      %2896 = vmatpush.msra.mxu0 0.0
      %2897 = vmatpush.msra.mxu0 0.0
      %2898 = vmatpush.msra.mxu0 0.0
      %2899 = vmatpush.msra.mxu0 0.0
      %2900 = vmatpush.msra.mxu0 0.0
      %2901 = vmatpush.msra.mxu0 0.0
      %2902 = vmatpush.msra.mxu0 %v2851
      %2903 = vmatpush.msra.mxu0 %v2848
      %2904 = vmatpush.msra.mxu0 %v2845
      %2905 = vmatpush.msra.mxu0 %v2842
      %2906 = vmatpush.msra.mxu0 %v2839
      %2907 = vmatpush.msra.mxu0 %v2836
      %2908 = vmatpush.msra.mxu0 %v2833
      %2909 = vmatpush.msra.mxu0 %v2830
      %2910 = vmatmul.f32.gmra.mxu0 %v2871
      %v2911 = vpop.f32.mrf.mxu0
      %v2912 = vadd.f32 0.0, %v2911
      %2913 = vmatmul.f32.gmra.mxu0 %v2874
      %v2914 = vpop.f32.mrf.mxu0
      %v2915 = vadd.f32 0.0, %v2914
      %2916 = vmatmul.f32.gmra.mxu0 %v2877
      %v2917 = vpop.f32.mrf.mxu0
      %v2918 = vadd.f32 0.0, %v2917
      %2919 = vmatmul.f32.gmra.mxu0 %v2880
      %v2920 = vpop.f32.mrf.mxu0
      %v2921 = vadd.f32 0.0, %v2920
      %2922 = vmatmul.f32.gmra.mxu0 %v2883
      %v2923 = vpop.f32.mrf.mxu0
      %v2924 = vadd.f32 0.0, %v2923
      %2925 = vmatmul.f32.gmra.mxu0 %v2886
      %v2926 = vpop.f32.mrf.mxu0
      %v2927 = vadd.f32 0.0, %v2926
      %2928 = vmatmul.f32.gmra.mxu0 %v2889
      %v2929 = vpop.f32.mrf.mxu0
      %v2930 = vadd.f32 0.0, %v2929
      %2931 = vmatmul.f32.gmra.mxu0 %v2892
      %v2932 = vpop.f32.mrf.mxu0
      %v2933 = vadd.f32 0.0, %v2932
      %2934 = vdwg.mxu0
      %v2936 = vsel %vm2869, %v2853, 0
      %v2939 = vsel %vm2869, %v2854, 0
      %v2942 = vsel %vm2869, %v2855, 0
      %v2945 = vsel %vm2869, %v2856, 0
      %v2948 = vsel %vm2869, %v2857, 0
      %v2951 = vsel %vm2869, %v2858, 0
      %v2954 = vsel %vm2869, %v2859, 0
      %v2957 = vsel %vm2869, %v2860, 0
      %2959 = vmatpush.msra.mxu0 0.0
      %2960 = vmatpush.msra.mxu0 0.0
      %2961 = vmatpush.msra.mxu0 0.0
      %2962 = vmatpush.msra.mxu0 0.0
      %2963 = vmatpush.msra.mxu0 0.0
      %2964 = vmatpush.msra.mxu0 0.0
      %2965 = vmatpush.msra.mxu0 0.0
      %2966 = vmatpush.msra.mxu0 0.0
      %2967 = vmatpush.msra.mxu0 %v2758
      %2968 = vmatpush.msra.mxu0 %v2757
      %2969 = vmatpush.msra.mxu0 %v2756
      %2970 = vmatpush.msra.mxu0 %v2755
      %2971 = vmatpush.msra.mxu0 %v2754
      %2972 = vmatpush.msra.mxu0 %v2753
      %2973 = vmatpush.msra.mxu0 %v2752
      %2974 = vmatpush.msra.mxu0 %v2751
      %2975 = vmatmul.f32.gmra.mxu0 %v2936
      %v2976 = vpop.f32.mrf.mxu0
      %v2977 = vadd.f32 %v2912, %v2976
      %2978 = vmatmul.f32.gmra.mxu0 %v2939
      %v2979 = vpop.f32.mrf.mxu0
      %v2980 = vadd.f32 %v2915, %v2979
      %2981 = vmatmul.f32.gmra.mxu0 %v2942
      %v2982 = vpop.f32.mrf.mxu0
      %v2983 = vadd.f32 %v2918, %v2982
      %2984 = vmatmul.f32.gmra.mxu0 %v2945
      %v2985 = vpop.f32.mrf.mxu0
      %v2986 = vadd.f32 %v2921, %v2985
      %2987 = vmatmul.f32.gmra.mxu0 %v2948
      %v2988 = vpop.f32.mrf.mxu0
      %v2989 = vadd.f32 %v2924, %v2988
      %2990 = vmatmul.f32.gmra.mxu0 %v2951
      %v2991 = vpop.f32.mrf.mxu0
      %v2992 = vadd.f32 %v2927, %v2991
      %2993 = vmatmul.f32.gmra.mxu0 %v2954
      %v2994 = vpop.f32.mrf.mxu0
      %v2995 = vadd.f32 %v2930, %v2994
      %2996 = vmatmul.f32.gmra.mxu0 %v2957
      %v2997 = vpop.f32.mrf.mxu0
      %v2998 = vadd.f32 %v2933, %v2997
      %2999 = vdwg.mxu0
      %v3000 = vld [vmem:[%s6] sm:$0xff]
      %v3001 = vld [vmem:[%s6 + $0x8] sm:$0xff]
      %v3002 = vld [vmem:[%s6 + $0x10] sm:$0xff]
      %v3003 = vld [vmem:[%s6 + $0x18] sm:$0xff]
      %v3004 = vld [vmem:[%s6 + $0x20] sm:$0xff]
      %v3005 = vld [vmem:[%s6 + $0x28] sm:$0xff]
      %v3006 = vld [vmem:[%s6 + $0x30] sm:$0xff]
      %v3007 = vld [vmem:[%s6 + $0x38] sm:$0xff]
      %v3008 = vadd.f32 %v2977, %v3000
      %v3009 = vadd.f32 %v2980, %v3001
      %v3010 = vadd.f32 %v2983, %v3002
      %v3011 = vadd.f32 %v2986, %v3003
      %v3012 = vadd.f32 %v2989, %v3004
      %v3013 = vadd.f32 %v2992, %v3005
      %v3014 = vadd.f32 %v2995, %v3006
      %v3015 = vadd.f32 %v2998, %v3007
      %v3016 = vmul.f32 %v3008, %v3008
      %v3017 = vmul.f32 %v3009, %v3009
      %v3018 = vmul.f32 %v3010, %v3010
      %v3019 = vmul.f32 %v3011, %v3011
      %v3020 = vmul.f32 %v3012, %v3012
      %v3021 = vmul.f32 %v3013, %v3013
      %v3022 = vmul.f32 %v3014, %v3014
      %v3023 = vmul.f32 %v3015, %v3015
      %v3024 = vmul.f32 %v3008, %v3016
      %v3025 = vmul.f32 %v3009, %v3017
      %v3026 = vmul.f32 %v3010, %v3018
      %v3027 = vmul.f32 %v3011, %v3019
      %v3028 = vmul.f32 %v3012, %v3020
      %v3029 = vmul.f32 %v3013, %v3021
      %v3030 = vmul.f32 %v3014, %v3022
      %v3031 = vmul.f32 %v3015, %v3023
      %v3032 = vmul.f32 %v3024, 0.044715
      %v3033 = vmul.f32 %v3025, 0.044715
      %v3034 = vmul.f32 %v3026, 0.044715
      %v3035 = vmul.f32 %v3027, 0.044715
      %v3036 = vmul.f32 %v3028, 0.044715
      %v3037 = vmul.f32 %v3029, 0.044715
      %v3038 = vmul.f32 %v3030, 0.044715
      %v3039 = vmul.f32 %v3031, 0.044715
      %v3040 = vadd.f32 %v3008, %v3032
      %v3041 = vadd.f32 %v3009, %v3033
      %v3042 = vadd.f32 %v3010, %v3034
      %v3043 = vadd.f32 %v3011, %v3035
      %v3044 = vadd.f32 %v3012, %v3036
      %v3045 = vadd.f32 %v3013, %v3037
      %v3046 = vadd.f32 %v3014, %v3038
      %v3047 = vadd.f32 %v3015, %v3039
      %v3048 = vmul.f32 %v3040, 0.7978846
      %v3049 = vmul.f32 %v3041, 0.7978846
      %v3050 = vmul.f32 %v3042, 0.7978846
      %v3051 = vmul.f32 %v3043, 0.7978846
      %v3052 = vmul.f32 %v3044, 0.7978846
      %v3053 = vmul.f32 %v3045, 0.7978846
      %v3054 = vmul.f32 %v3046, 0.7978846
      %v3055 = vmul.f32 %v3047, 0.7978846
      %v3056 = vtanh.pop %v3048
      %v3057 = vtanh.pop %v3049
      %v3058 = vtanh.pop %v3050
      %v3059 = vtanh.pop %v3051
      %v3060 = vtanh.pop %v3052
      %v3061 = vtanh.pop %v3053
      %v3062 = vtanh.pop %v3054
      %v3063 = vtanh.pop %v3055
      %v3064 = vadd.f32 %v3056, 1.0
      %v3065 = vadd.f32 %v3057, 1.0
      %v3066 = vadd.f32 %v3058, 1.0
      %v3067 = vadd.f32 %v3059, 1.0
      %v3068 = vadd.f32 %v3060, 1.0
      %v3069 = vadd.f32 %v3061, 1.0
      %v3070 = vadd.f32 %v3062, 1.0
      %v3071 = vadd.f32 %v3063, 1.0
      %v3072 = vmul.f32 %v3064, 0.5
      %v3073 = vmul.f32 %v3065, 0.5
      %v3074 = vmul.f32 %v3066, 0.5
      %v3075 = vmul.f32 %v3067, 0.5
      %v3076 = vmul.f32 %v3068, 0.5
      %v3077 = vmul.f32 %v3069, 0.5
      %v3078 = vmul.f32 %v3070, 0.5
      %v3079 = vmul.f32 %v3071, 0.5
      %v3080 = vmul.f32 %v3008, %v3072
      %v3081 = vmul.f32 %v3009, %v3073
      %v3082 = vmul.f32 %v3010, %v3074
      %v3083 = vmul.f32 %v3011, %v3075
      %v3084 = vmul.f32 %v3012, %v3076
      %v3085 = vmul.f32 %v3013, %v3077
      %v3086 = vmul.f32 %v3014, %v3078
      %v3087 = vmul.f32 %v3015, %v3079
      %v3088 = vld [vmem:[%s7] sm:$0x1]
      %v3089 = vld [vmem:[#allocation2] sm:$0x1]
      %v3091 = vsel %vm2869, %v3088, 0
      %3093 = vmatpush.msra.mxu0 0.0
      %3094 = vmatpush.msra.mxu0 0.0
      %3095 = vmatpush.msra.mxu0 0.0
      %3096 = vmatpush.msra.mxu0 0.0
      %3097 = vmatpush.msra.mxu0 0.0
      %3098 = vmatpush.msra.mxu0 0.0
      %3099 = vmatpush.msra.mxu0 0.0
      %3100 = vmatpush.msra.mxu0 0.0
      %3101 = vmatpush.msra.mxu0 %v3087
      %3102 = vmatpush.msra.mxu0 %v3086
      %3103 = vmatpush.msra.mxu0 %v3085
      %3104 = vmatpush.msra.mxu0 %v3084
      %3105 = vmatpush.msra.mxu0 %v3083
      %3106 = vmatpush.msra.mxu0 %v3082
      %3107 = vmatpush.msra.mxu0 %v3081
      %3108 = vmatpush.msra.mxu0 %v3080
      %3109 = vmatmul.f32.gmra.mxu0 %v3091
      %v3110 = vpop.f32.mrf.mxu0
      %v3111 = vadd.f32 %v3089, %v3110
      %3112 = vdwg.mxu0
      %vm3113 = vcmask 0
      %3114 = vst.msk [vmem:[%s330] sm:$0x1] %vm3113, %v3111
      %p3115 = scmp.lt.s32.totalorder %s22, 1
      %s3116 = scalar_select %p3115, %s22, 1
      %s3117 = scalar_lea.vmem %s9, %s3116
      // Predicated region
      $region57: #{metric_model_forward.1} parent=55 // pred_check
        %p3118 = pneg %p234
      $region58: #{metric_model_forward.1} parent=55 // pred_check_branch
        %3120 = sbr.rel (%p3118) target = $region60
      $region59: #{metric_model_forward.1} parent=55 // pred_region
        _
      $region60: #{metric_model_forward.1} parent=55 // pred_fallthru
        _
    $region56: #{metric_model_forward.1} parent=5 // pred_fallthru
      _
    %p3121 = scmp.le.s32.totalorder 2, %s17
    // Predicated region
    $region61: #{metric_model_forward.1} parent=5 // pred_check
      %p3122 = pneg %p3121
    $region62: #{metric_model_forward.1} parent=5 // pred_check_branch
      %3124 = sbr.rel (%p3122) target = $region64
    $region63: #{metric_model_forward.1} parent=5 // pred_region
      %s3125 = ssub.s32 %s17, 2
      // Predicated region
      $region65: #{metric_model_forward.1} parent=63 // pred_check
        %p3126 = pneg %p240
      $region66: #{metric_model_forward.1} parent=63 // pred_check_branch
        %3128 = sbr.rel (%p3126) target = $region68
      $region67: #{metric_model_forward.1} parent=63 // pred_region
        %p3129 = scmp.lt.s32.totalorder %s23, 1
        %s3130 = scalar_select %p3129, %s23, 1
        %s3131 = scalar_lea.vmem %s9, %s3130
      $region68: #{metric_model_forward.1} parent=63 // pred_fallthru
        _
    $region64: #{metric_model_forward.1} parent=5 // pred_fallthru
      _
  $region6: #{metric_model_forward.1} parent=0 // loop_footer
    %s21 = sadd.s32 1, %s17
  $region7: #{metric_model_forward.1} parent=0 // loop_footer_branch
    %16 = sbr.rel target = $region3
  $region8: #{metric_model_forward.1} parent=0 // loop_exit
    _

</llo_original>
